<compile_context>
chip_gen: v6e
topology: v6e:2x2x1
jax: 0.10.0
libtpu: 0.0.40
codegen_flags: <defaults>
</compile_context>

<pallas_src>
import functools

import jax
import jax.numpy as jnp
import numpy as np
from jax.experimental import pallas as pl
from jax.experimental.pallas import tpu as pltpu


# ----------------------------------------------------------------------------
# helpers
# ----------------------------------------------------------------------------
def _round_up(x, m):
    return (x + m - 1) // m * m


def _aggregate_first(in_dim, out_dim):
    """(A @ X) @ W is cheaper than A @ (X @ W) iff in_dim < out_dim."""
    return in_dim < out_dim


# ----------------------------------------------------------------------------
# Pallas kernel: full VAE forward for ONE graph per grid step
# ----------------------------------------------------------------------------
def _gcn_layer(A, X_b, w_ref, b_ref, aggregate_first):
    """relu(A @ X @ W + b) with a static matmul-association choice."""
    f32, bf16 = jnp.float32, jnp.bfloat16
    if aggregate_first:                      # (A @ X) @ W
        t = jnp.dot(A, X_b, preferred_element_type=f32).astype(bf16)
        h = jnp.dot(t, w_ref[...], preferred_element_type=f32)
    else:                                    # A @ (X @ W)
        t = jnp.dot(X_b, w_ref[...], preferred_element_type=f32).astype(bf16)
        h = jnp.dot(A, t, preferred_element_type=f32)
    return jnp.maximum(h + b_ref[...], 0.0)  # bias / ReLU in f32


def _vae_kernel(a_ref, x_ref,
                w1_ref, b1_ref, w2_ref, b2_ref,
                wmulv_ref, bmulv_ref,
                w3_ref, b3_ref, w4_ref, b4_ref,
                eps_ref,
                out_ref,
                *, latent_dim, agg_first_1, agg_first_2):
    f32, bf16 = jnp.float32, jnp.bfloat16
    A = a_ref[0]                 # [N, N] bf16 normalized adjacency (self loops)
    x = x_ref[0]                 # [N, F] bf16 embedded node features

    # --- encoder: two GCN layers ---------------------------------------------
    h = _gcn_layer(A, x, w1_ref, b1_ref, agg_first_1).astype(bf16)
    h = _gcn_layer(A, h, w2_ref, b2_ref, agg_first_2).astype(bf16)

    # --- fused fc_mu || fc_logvar: single [H, 2L] matmul ----------------------
    mulv = jnp.dot(h, wmulv_ref[...], preferred_element_type=f32) + bmulv_ref[...]
    mu = mulv[:, :latent_dim]
    logvar = mulv[:, latent_dim:]

    # --- reparameterize: z = mu + eps * exp(0.5 * logvar)  (f32, EUP exp) -----
    z = mu + eps_ref[0] * jnp.exp(0.5 * logvar)

    # --- decoder: fc4(relu(fc3(z)))   (w4/b4 zero-padded to lane-dense V_pad) -
    h3 = jnp.dot(z.astype(bf16), w3_ref[...], preferred_element_type=f32) + b3_ref[...]
    h3 = jnp.maximum(h3, 0.0)
    recon_p = jnp.dot(h3.astype(bf16), w4_ref[...],
                      preferred_element_type=f32) + b4_ref[...]     # [N, V_pad]

    # Single lane-dense store: [N, V_pad + 2L], (V_pad + 2L) % 128 == 0.
    out_ref[0] = jnp.concatenate([recon_p, mulv], axis=-1)


# ----------------------------------------------------------------------------
# Wrapper: param fusion/padding + pallas_call with a batched graph grid
# ----------------------------------------------------------------------------
def prepare_kernel_params(params, latent_dim, vocab_size):
    """Fuse fc_mu/fc_logvar, pad w4/b4 to a lane-dense slab, cast to bf16."""
    bf16 = jnp.bfloat16
    w_mulv = jnp.concatenate([params["w_mu"], params["w_lv"]], axis=1)  # [H,2L]
    b_mulv = jnp.concatenate([params["b_mu"], params["b_lv"]], axis=1)  # [1,2L]
    slab = _round_up(vocab_size + 2 * latent_dim, 128)
    v_pad = slab - 2 * latent_dim
    w4p = jnp.pad(params["w4"], ((0, 0), (0, v_pad - vocab_size)))
    b4p = jnp.pad(params["b4"], ((0, 0), (0, v_pad - vocab_size)))
    kparams = dict(
        w1=params["w1"].astype(bf16), b1=params["b1"],
        w2=params["w2"].astype(bf16), b2=params["b2"],
        w_mulv=w_mulv.astype(bf16), b_mulv=b_mulv,
        w3=params["w3"].astype(bf16), b3=params["b3"],
        w4p=w4p.astype(bf16), b4p=b4p,
    )
    return kparams, slab, v_pad


def vae_forward_pallas(a_norm, x_emb, kparams, eps, *, latent_dim, vocab_size):
    """Batched fused VAE forward.

    a_norm : [G, N, N] f32 normalized adjacency per graph
    x_emb  : [G, N, F] f32 embedded node features
    kparams: dict from prepare_kernel_params (bf16 weights, f32 biases)
    eps    : [G, N, L] f32 standard-normal noise
    returns (recon [G,N,V], mu [G,N,L], logvar [G,N,L]) as f32
    """
    G, N, F = x_emb.shape
    H = kparams["w1"].shape[1]
    L = latent_dim
    Vp = kparams["w4p"].shape[1]
    slab = Vp + 2 * L

    agg_first_1 = _aggregate_first(F, H)
    agg_first_2 = _aggregate_first(H, H)

    a_bf = a_norm.astype(jnp.bfloat16)
    x_bf = x_emb.astype(jnp.bfloat16)

    inputs = (
        a_bf, x_bf,
        kparams["w1"], kparams["b1"], kparams["w2"], kparams["b2"],
        kparams["w_mulv"], kparams["b_mulv"],
        kparams["w3"], kparams["b3"], kparams["w4p"], kparams["b4p"],
        eps,
    )

    # Per-graph (grid-varying) blocks and grid-constant weight blocks.
    def graph_block(shape):
        return pl.BlockSpec((1,) + shape, lambda g: (g, 0, 0))

    def const_block(arr):
        nd = arr.ndim
        return pl.BlockSpec(arr.shape, lambda g, _nd=nd: (0,) * _nd)

    in_specs = [
        graph_block((N, N)),                       # A
        graph_block((N, F)),                       # X
        const_block(kparams["w1"]), const_block(kparams["b1"]),
        const_block(kparams["w2"]), const_block(kparams["b2"]),
        const_block(kparams["w_mulv"]), const_block(kparams["b_mulv"]),
        const_block(kparams["w3"]), const_block(kparams["b3"]),
        const_block(kparams["w4p"]), const_block(kparams["b4p"]),
        graph_block((N, L)),                       # eps
    ]
    out_specs = graph_block((N, slab))
    out_shape = jax.ShapeDtypeStruct((G, N, slab), jnp.float32)

    # Cost estimate (scheduling hint for XLA around the custom call).
    def mm(m, k, n):
        return 2 * m * k * n
    l1 = mm(N, N, F) + mm(N, F, H) if agg_first_1 else mm(N, F, H) + mm(N, N, H)
    l2 = mm(N, N, H) + mm(N, H, H) if agg_first_2 else mm(N, H, H) + mm(N, N, H)
    flops = G * (l1 + l2 + mm(N, H, 2 * L) + mm(N, L, H) + mm(N, H, Vp))
    bytes_accessed = sum(int(np.prod(a.shape)) * a.dtype.itemsize for a in inputs)
    bytes_accessed += int(np.prod(out_shape.shape)) * 4
    cost = pl.CostEstimate(flops=flops, transcendentals=G * N * L,
                           bytes_accessed=bytes_accessed)

    # VMEM budget derived from actual per-step block sizes (x2 double buffer).
    weight_bytes = sum(int(np.prod(v.shape)) * v.dtype.itemsize
                       for v in kparams.values())
    per_step_block_bytes = (N * N * 2 + N * F * 2 + N * L * 4 + N * slab * 4
                            + weight_bytes)
    vmem_limit = int(max(2 * per_step_block_bytes + (4 << 20), 16 << 20))

    # TODO(synk): for N beyond a few thousand (v7x's 64 MiB VMEM), the dense
    # [N, N] adjacency must be row-tiled; because GCN layer 2 aggregates over
    # ALL nodes of layer-1 output, that requires a two-pass structure
    # (materialize h1, then a row-tiled second pass) rather than this
    # single-pass per-graph kernel.
    kern = functools.partial(_vae_kernel, latent_dim=L,
                             agg_first_1=agg_first_1, agg_first_2=agg_first_2)
    packed = pl.pallas_call(
        kern,
        out_shape=out_shape,
        grid_spec=pltpu.PrefetchScalarGridSpec(
            num_scalar_prefetch=0,
            grid=(G,),
            in_specs=in_specs,
            out_specs=out_specs),
        compiler_params=pltpu.CompilerParams(
            dimension_semantics=("parallel",),
            vmem_limit_bytes=vmem_limit),
        cost_estimate=cost,
    )(*inputs)

    recon = packed[..., :vocab_size]
    mu = packed[..., Vp:Vp + L]
    logvar = packed[..., Vp + L:Vp + 2 * L]
    return recon, mu, logvar


# ----------------------------------------------------------------------------
# Plain-JAX glue: embedding lookup, GCN adjacency normalization, params
# ----------------------------------------------------------------------------
def build_norm_adjacency(edge_index, num_nodes):
    """Dense D^{-1/2}(A+I)D^{-1/2}, matching torch_geometric GCNConv defaults."""
    src, dst = edge_index[0], edge_index[1]
    A = jnp.zeros((num_nodes, num_nodes), jnp.float32)
    A = A.at[dst, src].add(1.0)                       # A[i, j]: edge j -> i
    A = A + jnp.eye(num_nodes, dtype=jnp.float32)     # add self loops
    deg = A.sum(axis=1)
    deg_inv_sqrt = jnp.where(deg > 0, 1.0 / jnp.sqrt(deg), 0.0)
    return deg_inv_sqrt[:, None] * A * deg_inv_sqrt[None, :]


def init_params(key, num_features, hidden_dim, latent_dim, vocab_size):
    """Deterministic synthetic parameters (Linear-style uniform init)."""
    ks = jax.random.split(key, 16)

    def lin(kw, kb, fan_in, fan_out):
        bound = 1.0 / np.sqrt(fan_in)
        w = jax.random.uniform(kw, (fan_in, fan_out), jnp.float32, -bound, bound)
        b = jax.random.uniform(kb, (1, fan_out), jnp.float32, -bound, bound)
        return w, b

    params = {}
    params["embedding"] = jax.random.normal(ks[0], (vocab_size, num_features),
                                            jnp.float32)
    params["w1"], params["b1"] = lin(ks[1], ks[2], num_features, hidden_dim)
    params["w2"], params["b2"] = lin(ks[3], ks[4], hidden_dim, hidden_dim)
    params["w_mu"], params["b_mu"] = lin(ks[5], ks[6], hidden_dim, latent_dim)
    params["w_lv"], params["b_lv"] = lin(ks[7], ks[8], hidden_dim, latent_dim)
    params["w3"], params["b3"] = lin(ks[9], ks[10], latent_dim, hidden_dim)
    params["w4"], params["b4"] = lin(ks[11], ks[12], hidden_dim, vocab_size)
    return params


def vae_forward_reference(a_norm, x_emb, kparams, eps, *, latent_dim, vocab_size):
    """Pure-JAX reference replicating the kernel's bf16-operand / f32-acc math."""
    f32, bf16 = jnp.float32, jnp.bfloat16
    F = x_emb.shape[-1]
    H = kparams["w1"].shape[1]
    agg1 = _aggregate_first(F, H)
    agg2 = _aggregate_first(H, H)

    def gcn(A, X_b, W, b, agg):
        if agg:
            t = jnp.dot(A, X_b, preferred_element_type=f32).astype(bf16)
            h = jnp.dot(t, W, preferred_element_type=f32)
        else:
            t = jnp.dot(X_b, W, preferred_element_type=f32).astype(bf16)
            h = jnp.dot(A, t, preferred_element_type=f32)
        return jnp.maximum(h + b, 0.0)

    def one_graph(A, X, e):
        A = A.astype(bf16)
        X = X.astype(bf16)
        h = gcn(A, X, kparams["w1"], kparams["b1"], agg1).astype(bf16)
        h = gcn(A, h, kparams["w2"], kparams["b2"], agg2).astype(bf16)
        mulv = jnp.dot(h, kparams["w_mulv"],
                       preferred_element_type=f32) + kparams["b_mulv"]
        mu = mulv[:, :latent_dim]
        logvar = mulv[:, latent_dim:]
        z = mu + e * jnp.exp(0.5 * logvar)
        h3 = jnp.maximum(jnp.dot(z.astype(bf16), kparams["w3"],
                                 preferred_element_type=f32) + kparams["b3"], 0.0)
        recon_p = jnp.dot(h3.astype(bf16), kparams["w4p"],
                          preferred_element_type=f32) + kparams["b4p"]
        return recon_p[:, :vocab_size], mu, logvar

    return jax.vmap(one_graph)(a_norm, x_emb, eps)


# ----------------------------------------------------------------------------
if __name__ == "__main__":
    # Small, forward-consistent shapes (batched graphs).
    NUM_GRAPHS = 4
    NUM_NODES = 64        # nodes (tokens) per graph
    NUM_FEATURES = 16     # embedding dim
    HIDDEN_DIM = 64
    LATENT_DIM = 16
    VOCAB_SIZE = 64
    NUM_EDGES = 128       # edges per graph

    key = jax.random.PRNGKey(0)
    k_tok, k_src, k_dst, k_eps, k_par = jax.random.split(key, 5)

    # data.x: node token ids; data.edge_index: [2, E] int graph connectivity.
    node_tokens = jax.random.randint(k_tok, (NUM_GRAPHS, NUM_NODES), 0, VOCAB_SIZE)
    edge_index = jnp.stack([
        jax.random.randint(k_src, (NUM_GRAPHS, NUM_EDGES), 0, NUM_NODES),
        jax.random.randint(k_dst, (NUM_GRAPHS, NUM_EDGES), 0, NUM_NODES),
    ], axis=1)                                            # [G, 2, E]

    params = init_params(k_par, NUM_FEATURES, HIDDEN_DIM, LATENT_DIM, VOCAB_SIZE)
    kparams, slab, v_pad = prepare_kernel_params(params, LATENT_DIM, VOCAB_SIZE)

    # Glue: embedding lookup + GCN normalized adjacency + reparam noise.
    x_emb = jnp.take(params["embedding"], node_tokens, axis=0)   # [G, N, F]
    a_norm = jax.vmap(lambda ei: build_norm_adjacency(ei, NUM_NODES))(edge_index)
    eps = jax.random.normal(k_eps, (NUM_GRAPHS, NUM_NODES, LATENT_DIM),
                            jnp.float32)

    recon, mu, logvar = jax.block_until_ready(
        vae_forward_pallas(a_norm, x_emb, kparams, eps,
                           latent_dim=LATENT_DIM, vocab_size=VOCAB_SIZE))

    recon_ref, mu_ref, logvar_ref = vae_forward_reference(
        a_norm, x_emb, kparams, eps,
        latent_dim=LATENT_DIM, vocab_size=VOCAB_SIZE)

    np.testing.assert_allclose(np.asarray(recon), np.asarray(recon_ref),
                               rtol=1e-2, atol=1e-2)
    np.testing.assert_allclose(np.asarray(mu), np.asarray(mu_ref),
                               rtol=1e-2, atol=1e-2)
    np.testing.assert_allclose(np.asarray(logvar), np.asarray(logvar_ref),
                               rtol=1e-2, atol=1e-2)

    print("KERNEL_OK")
</pallas_src>

<mosaic_0001>
module attributes {stable_mosaic.version = 11 : i64} {
  func.func @_vae_kernel(%arg0: i32, %arg1: memref<1x64x64xbf16, #tpu.memory_space<vmem>>, %arg2: memref<1x64x16xbf16, #tpu.memory_space<vmem>>, %arg3: memref<16x64xbf16, #tpu.memory_space<vmem>>, %arg4: memref<1x64xf32, #tpu.memory_space<vmem>>, %arg5: memref<64x64xbf16, #tpu.memory_space<vmem>>, %arg6: memref<1x64xf32, #tpu.memory_space<vmem>>, %arg7: memref<64x32xbf16, #tpu.memory_space<vmem>>, %arg8: memref<1x32xf32, #tpu.memory_space<vmem>>, %arg9: memref<16x64xbf16, #tpu.memory_space<vmem>>, %arg10: memref<1x64xf32, #tpu.memory_space<vmem>>, %arg11: memref<64x96xbf16, #tpu.memory_space<vmem>>, %arg12: memref<1x96xf32, #tpu.memory_space<vmem>>, %arg13: memref<1x64x16xf32, #tpu.memory_space<vmem>>, %arg14: memref<1x64x128xf32, #tpu.memory_space<vmem>>) attributes {dimension_semantics = [#tpu.dimension_semantics<parallel>], iteration_bounds = array<i64: 4>, scalar_prefetch = 0 : i64, scratch_operands = 0 : i64, tpu.core_type = #tpu.core_type<tc>, window_params = [{transform_indices = @transform_0, window_bounds = array<i64: 1, 64, 64>}, {transform_indices = @transform_1, window_bounds = array<i64: 1, 64, 16>}, {pipeline_mode = #tpu.pipeline_mode<synchronous>, transform_indices = @transform_2, window_bounds = array<i64: 16, 64>}, {pipeline_mode = #tpu.pipeline_mode<synchronous>, transform_indices = @transform_3, window_bounds = array<i64: 1, 64>}, {pipeline_mode = #tpu.pipeline_mode<synchronous>, transform_indices = @transform_4, window_bounds = array<i64: 64, 64>}, {pipeline_mode = #tpu.pipeline_mode<synchronous>, transform_indices = @transform_5, window_bounds = array<i64: 1, 64>}, {pipeline_mode = #tpu.pipeline_mode<synchronous>, transform_indices = @transform_6, window_bounds = array<i64: 64, 32>}, {pipeline_mode = #tpu.pipeline_mode<synchronous>, transform_indices = @transform_7, window_bounds = array<i64: 1, 32>}, {pipeline_mode = #tpu.pipeline_mode<synchronous>, transform_indices = @transform_8, window_bounds = array<i64: 16, 64>}, {pipeline_mode = #tpu.pipeline_mode<synchronous>, transform_indices = @transform_9, window_bounds = array<i64: 1, 64>}, {pipeline_mode = #tpu.pipeline_mode<synchronous>, transform_indices = @transform_10, window_bounds = array<i64: 64, 96>}, {pipeline_mode = #tpu.pipeline_mode<synchronous>, transform_indices = @transform_11, window_bounds = array<i64: 1, 96>}, {transform_indices = @transform_12, window_bounds = array<i64: 1, 64, 16>}, {transform_indices = @transform_13, window_bounds = array<i64: 1, 64, 128>}]} {
    %c0 = arith.constant 0 : index
    %c0_0 = arith.constant 0 : index
    %c0_1 = arith.constant 0 : index
    %0 = vector.load %arg1[%c0, %c0_0, %c0_1] : memref<1x64x64xbf16, #tpu.memory_space<vmem>>, vector<1x64x64xbf16>
    %1 = vector.shape_cast %0 : vector<1x64x64xbf16> to vector<64x64xbf16>
    %c0_2 = arith.constant 0 : index
    %c0_3 = arith.constant 0 : index
    %c0_4 = arith.constant 0 : index
    %2 = vector.load %arg2[%c0_2, %c0_3, %c0_4] : memref<1x64x16xbf16, #tpu.memory_space<vmem>>, vector<1x64x16xbf16>
    %3 = vector.shape_cast %2 : vector<1x64x16xbf16> to vector<64x16xbf16>
    %cst = arith.constant dense<0.000000e+00> : vector<64x16xf32>
    %4 = tpu.matmul %1, %3, %cst {dimension_numbers = #tpu.dot_dimension_numbers<[1], [0], [0], [1], [0, 0, 1, 1], [], []>} : vector<64x64xbf16>, vector<64x16xbf16>, vector<64x16xf32> -> vector<64x16xf32>
    %5 = arith.truncf %4 : vector<64x16xf32> to vector<64x16xbf16>
    %c0_5 = arith.constant 0 : index
    %c0_6 = arith.constant 0 : index
    %6 = vector.load %arg3[%c0_5, %c0_6] : memref<16x64xbf16, #tpu.memory_space<vmem>>, vector<16x64xbf16>
    %cst_7 = arith.constant dense<0.000000e+00> : vector<64x64xf32>
    %7 = tpu.matmul %5, %6, %cst_7 {dimension_numbers = #tpu.dot_dimension_numbers<[1], [0], [0], [1], [0, 0, 1, 1], [], []>} : vector<64x16xbf16>, vector<16x64xbf16>, vector<64x64xf32> -> vector<64x64xf32>
    %c0_8 = arith.constant 0 : index
    %c0_9 = arith.constant 0 : index
    %8 = vector.load %arg4[%c0_8, %c0_9] : memref<1x64xf32, #tpu.memory_space<vmem>>, vector<1x64xf32>
    %9 = vector.broadcast %8 : vector<1x64xf32> to vector<64x64xf32>
    %10 = arith.addf %7, %9 : vector<64x64xf32>
    %cst_10 = arith.constant 0.000000e+00 : f32
    %11 = vector.broadcast %cst_10 : f32 to vector<64x64xf32>
    %12 = arith.maximumf %10, %11 : vector<64x64xf32>
    %13 = arith.truncf %12 : vector<64x64xf32> to vector<64x64xbf16>
    %c0_11 = arith.constant 0 : index
    %c0_12 = arith.constant 0 : index
    %14 = vector.load %arg5[%c0_11, %c0_12] : memref<64x64xbf16, #tpu.memory_space<vmem>>, vector<64x64xbf16>
    %cst_13 = arith.constant dense<0.000000e+00> : vector<64x64xf32>
    %15 = tpu.matmul %13, %14, %cst_13 {dimension_numbers = #tpu.dot_dimension_numbers<[1], [0], [0], [1], [0, 0, 1, 1], [], []>} : vector<64x64xbf16>, vector<64x64xbf16>, vector<64x64xf32> -> vector<64x64xf32>
    %16 = arith.truncf %15 : vector<64x64xf32> to vector<64x64xbf16>
    %cst_14 = arith.constant dense<0.000000e+00> : vector<64x64xf32>
    %17 = tpu.matmul %1, %16, %cst_14 {dimension_numbers = #tpu.dot_dimension_numbers<[1], [0], [0], [1], [0, 0, 1, 1], [], []>} : vector<64x64xbf16>, vector<64x64xbf16>, vector<64x64xf32> -> vector<64x64xf32>
    %c0_15 = arith.constant 0 : index
    %c0_16 = arith.constant 0 : index
    %18 = vector.load %arg6[%c0_15, %c0_16] : memref<1x64xf32, #tpu.memory_space<vmem>>, vector<1x64xf32>
    %19 = vector.broadcast %18 : vector<1x64xf32> to vector<64x64xf32>
    %20 = arith.addf %17, %19 : vector<64x64xf32>
    %cst_17 = arith.constant 0.000000e+00 : f32
    %21 = vector.broadcast %cst_17 : f32 to vector<64x64xf32>
    %22 = arith.maximumf %20, %21 : vector<64x64xf32>
    %23 = arith.truncf %22 : vector<64x64xf32> to vector<64x64xbf16>
    %c0_18 = arith.constant 0 : index
    %c0_19 = arith.constant 0 : index
    %24 = vector.load %arg7[%c0_18, %c0_19] : memref<64x32xbf16, #tpu.memory_space<vmem>>, vector<64x32xbf16>
    %cst_20 = arith.constant dense<0.000000e+00> : vector<64x32xf32>
    %25 = tpu.matmul %23, %24, %cst_20 {dimension_numbers = #tpu.dot_dimension_numbers<[1], [0], [0], [1], [0, 0, 1, 1], [], []>} : vector<64x64xbf16>, vector<64x32xbf16>, vector<64x32xf32> -> vector<64x32xf32>
    %c0_21 = arith.constant 0 : index
    %c0_22 = arith.constant 0 : index
    %26 = vector.load %arg8[%c0_21, %c0_22] : memref<1x32xf32, #tpu.memory_space<vmem>>, vector<1x32xf32>
    %27 = vector.broadcast %26 : vector<1x32xf32> to vector<64x32xf32>
    %28 = arith.addf %25, %27 : vector<64x32xf32>
    %29 = vector.extract_strided_slice %28 {offsets = [0, 0], sizes = [64, 16], strides = [1, 1]} : vector<64x32xf32> to vector<64x16xf32>
    %30 = vector.extract_strided_slice %28 {offsets = [0, 16], sizes = [64, 16], strides = [1, 1]} : vector<64x32xf32> to vector<64x16xf32>
    %c0_23 = arith.constant 0 : index
    %c0_24 = arith.constant 0 : index
    %c0_25 = arith.constant 0 : index
    %31 = vector.load %arg13[%c0_23, %c0_24, %c0_25] : memref<1x64x16xf32, #tpu.memory_space<vmem>>, vector<1x64x16xf32>
    %32 = vector.shape_cast %31 : vector<1x64x16xf32> to vector<64x16xf32>
    %cst_26 = arith.constant 5.000000e-01 : f32
    %33 = vector.broadcast %cst_26 : f32 to vector<64x16xf32>
    %34 = arith.mulf %33, %30 : vector<64x16xf32>
    %35 = math.exp %34 : vector<64x16xf32>
    %36 = arith.mulf %32, %35 : vector<64x16xf32>
    %37 = arith.addf %29, %36 : vector<64x16xf32>
    %38 = arith.truncf %37 : vector<64x16xf32> to vector<64x16xbf16>
    %c0_27 = arith.constant 0 : index
    %c0_28 = arith.constant 0 : index
    %39 = vector.load %arg9[%c0_27, %c0_28] : memref<16x64xbf16, #tpu.memory_space<vmem>>, vector<16x64xbf16>
    %cst_29 = arith.constant dense<0.000000e+00> : vector<64x64xf32>
    %40 = tpu.matmul %38, %39, %cst_29 {dimension_numbers = #tpu.dot_dimension_numbers<[1], [0], [0], [1], [0, 0, 1, 1], [], []>} : vector<64x16xbf16>, vector<16x64xbf16>, vector<64x64xf32> -> vector<64x64xf32>
    %c0_30 = arith.constant 0 : index
    %c0_31 = arith.constant 0 : index
    %41 = vector.load %arg10[%c0_30, %c0_31] : memref<1x64xf32, #tpu.memory_space<vmem>>, vector<1x64xf32>
    %42 = vector.broadcast %41 : vector<1x64xf32> to vector<64x64xf32>
    %43 = arith.addf %40, %42 : vector<64x64xf32>
    %cst_32 = arith.constant 0.000000e+00 : f32
    %44 = vector.broadcast %cst_32 : f32 to vector<64x64xf32>
    %45 = arith.maximumf %43, %44 : vector<64x64xf32>
    %46 = arith.truncf %45 : vector<64x64xf32> to vector<64x64xbf16>
    %c0_33 = arith.constant 0 : index
    %c0_34 = arith.constant 0 : index
    %47 = vector.load %arg11[%c0_33, %c0_34] : memref<64x96xbf16, #tpu.memory_space<vmem>>, vector<64x96xbf16>
    %cst_35 = arith.constant dense<0.000000e+00> : vector<64x96xf32>
    %48 = tpu.matmul %46, %47, %cst_35 {dimension_numbers = #tpu.dot_dimension_numbers<[1], [0], [0], [1], [0, 0, 1, 1], [], []>} : vector<64x64xbf16>, vector<64x96xbf16>, vector<64x96xf32> -> vector<64x96xf32>
    %c0_36 = arith.constant 0 : index
    %c0_37 = arith.constant 0 : index
    %49 = vector.load %arg12[%c0_36, %c0_37] : memref<1x96xf32, #tpu.memory_space<vmem>>, vector<1x96xf32>
    %50 = vector.broadcast %49 : vector<1x96xf32> to vector<64x96xf32>
    %51 = arith.addf %48, %50 : vector<64x96xf32>
    %52 = tpu.concatenate %51, %28 in 1 : vector<64x96xf32>, vector<64x32xf32> -> vector<64x128xf32>
    %c0_38 = arith.constant 0 : index
    %c0_39 = arith.constant 0 : index
    %c0_40 = arith.constant 0 : index
    %53 = vector.load %arg14[%c0_38, %c0_39, %c0_40] : memref<1x64x128xf32, #tpu.memory_space<vmem>>, vector<1x64x128xf32>
    %54 = vector.shape_cast %53 : vector<1x64x128xf32> to vector<64x128xf32>
    %55 = vector.shape_cast %52 : vector<64x128xf32> to vector<1x64x128xf32>
    tpu.vector_store %arg14[%c0_38, %c0_39, %c0_40], %55 {strides = array<i32>} : memref<1x64x128xf32, #tpu.memory_space<vmem>>, vector<1x64x128xf32>,
    return
  }
  func.func @transform_0(%arg0: i32) -> (i32, i32, i32) {
    %c0_i32 = arith.constant 0 : i32
    %c0_i32_0 = arith.constant 0 : i32
    %c0_i32_1 = arith.constant 0 : i32
    return %arg0, %c0_i32, %c0_i32_0 : i32, i32, i32
  }
  func.func @transform_1(%arg0: i32) -> (i32, i32, i32) {
    %c0_i32 = arith.constant 0 : i32
    %c0_i32_0 = arith.constant 0 : i32
    %c0_i32_1 = arith.constant 0 : i32
    return %arg0, %c0_i32, %c0_i32_0 : i32, i32, i32
  }
  func.func @transform_2(%arg0: i32) -> (i32, i32) {
    %c0_i32 = arith.constant 0 : i32
    %c0_i32_0 = arith.constant 0 : i32
    %c0_i32_1 = arith.constant 0 : i32
    return %c0_i32, %c0_i32_0 : i32, i32
  }
  func.func @transform_3(%arg0: i32) -> (i32, i32) {
    %c0_i32 = arith.constant 0 : i32
    %c0_i32_0 = arith.constant 0 : i32
    %c0_i32_1 = arith.constant 0 : i32
    return %c0_i32, %c0_i32_0 : i32, i32
  }
  func.func @transform_4(%arg0: i32) -> (i32, i32) {
    %c0_i32 = arith.constant 0 : i32
    %c0_i32_0 = arith.constant 0 : i32
    %c0_i32_1 = arith.constant 0 : i32
    return %c0_i32, %c0_i32_0 : i32, i32
  }
  func.func @transform_5(%arg0: i32) -> (i32, i32) {
    %c0_i32 = arith.constant 0 : i32
    %c0_i32_0 = arith.constant 0 : i32
    %c0_i32_1 = arith.constant 0 : i32
    return %c0_i32, %c0_i32_0 : i32, i32
  }
  func.func @transform_6(%arg0: i32) -> (i32, i32) {
    %c0_i32 = arith.constant 0 : i32
    %c0_i32_0 = arith.constant 0 : i32
    %c0_i32_1 = arith.constant 0 : i32
    return %c0_i32, %c0_i32_0 : i32, i32
  }
  func.func @transform_7(%arg0: i32) -> (i32, i32) {
    %c0_i32 = arith.constant 0 : i32
    %c0_i32_0 = arith.constant 0 : i32
    %c0_i32_1 = arith.constant 0 : i32
    return %c0_i32, %c0_i32_0 : i32, i32
  }
  func.func @transform_8(%arg0: i32) -> (i32, i32) {
    %c0_i32 = arith.constant 0 : i32
    %c0_i32_0 = arith.constant 0 : i32
    %c0_i32_1 = arith.constant 0 : i32
    return %c0_i32, %c0_i32_0 : i32, i32
  }
  func.func @transform_9(%arg0: i32) -> (i32, i32) {
    %c0_i32 = arith.constant 0 : i32
    %c0_i32_0 = arith.constant 0 : i32
    %c0_i32_1 = arith.constant 0 : i32
    return %c0_i32, %c0_i32_0 : i32, i32
  }
  func.func @transform_10(%arg0: i32) -> (i32, i32) {
    %c0_i32 = arith.constant 0 : i32
    %c0_i32_0 = arith.constant 0 : i32
    %c0_i32_1 = arith.constant 0 : i32
    return %c0_i32, %c0_i32_0 : i32, i32
  }
  func.func @transform_11(%arg0: i32) -> (i32, i32) {
    %c0_i32 = arith.constant 0 : i32
    %c0_i32_0 = arith.constant 0 : i32
    %c0_i32_1 = arith.constant 0 : i32
    return %c0_i32, %c0_i32_0 : i32, i32
  }
  func.func @transform_12(%arg0: i32) -> (i32, i32, i32) {
    %c0_i32 = arith.constant 0 : i32
    %c0_i32_0 = arith.constant 0 : i32
    %c0_i32_1 = arith.constant 0 : i32
    return %arg0, %c0_i32, %c0_i32_0 : i32, i32, i32
  }
  func.func @transform_13(%arg0: i32) -> (i32, i32, i32) {
    %c0_i32 = arith.constant 0 : i32
    %c0_i32_0 = arith.constant 0 : i32
    %c0_i32_1 = arith.constant 0 : i32
    return %arg0, %c0_i32, %c0_i32_0 : i32, i32, i32
  }
}

</mosaic_0001>

<llo_original>
// kernel: tpu_custom_call.1
$region0: #{tpu_custom_call.1}
  #allocation0 [shape = 'u32[]', space=smem, size = 0x4, offset = 0x4, fixed_abs, tag = 'smem constant byte address 0x4 - core index']
  #allocation1 [shape = 'u32[144,128]{1,0:T(1,128)}', space=vmem, size = 0x12000, scoped, tag = 'internal scratch']
  %s0 = inlined_call_operand.vmem [shape: bf16[4,64,64], index: 0, kind: input, shape index: {}]
  %s1 = inlined_call_operand.vmem [shape: bf16[4,64,16], index: 1, kind: input, shape index: {}]
  %s2 = inlined_call_operand.vmem [shape: bf16[16,64], index: 2, kind: input, shape index: {}]
  %s3 = inlined_call_operand.vmem [shape: f32[1,64], index: 3, kind: input, shape index: {}]
  %s4 = inlined_call_operand.vmem [shape: bf16[64,64], index: 4, kind: input, shape index: {}]
  %s5 = inlined_call_operand.vmem [shape: f32[1,64], index: 5, kind: input, shape index: {}]
  %s6 = inlined_call_operand.vmem [shape: bf16[64,32], index: 6, kind: input, shape index: {}]
  %s7 = inlined_call_operand.vmem [shape: f32[1,32], index: 7, kind: input, shape index: {}]
  %s8 = inlined_call_operand.vmem [shape: bf16[16,64], index: 8, kind: input, shape index: {}]
  %s9 = inlined_call_operand.vmem [shape: f32[1,64], index: 9, kind: input, shape index: {}]
  %s10 = inlined_call_operand.vmem [shape: bf16[64,96], index: 10, kind: input, shape index: {}]
  %s11 = inlined_call_operand.vmem [shape: f32[1,96], index: 11, kind: input, shape index: {}]
  %s12 = inlined_call_operand.vmem [shape: f32[4,64,16], index: 12, kind: input, shape index: {}]
  %s13 = inlined_call_operand.hbm [shape: f32[4,64,128], index: 13, kind: output, shape index: {}]
  %s14 = sld [smem:[#allocation0]]
  $region85: #{tpu_custom_call.1} parent=0
    _
  %s16 = ssub.s32 1, %s14
  %s17 = scalar_select 0, %s16, %s14
  $region1: #{tpu_custom_call.1} parent=0
    #allocation2 [shape = 'u8[65536]{0}', space=vmem, size = 0x10000, scoped, tag = 'output window, operand 0']
    #allocation3 [shape = 's32[2]{0}', space=sflag, size = 0x8, scoped, tag = 'scoped memory for tpu_custom_call.1']
    %18 = vsyncpa [#allocation3], 0
    %s19 = scalar_lea.sflag [#allocation3], 1
    %20 = vsyncpa %s19, 0
    loop: start=0, step=1, limit=6
    $region2: #{tpu_custom_call.1} parent=1 // loop_pre_header
      _
    $region3: #{tpu_custom_call.1} parent=1 // loop_header
      %s22 = sphi 0, %s26
      %p23 = scmp.ge.s32.totalorder %s22, 6
      %s32 = sphi 0, %s34
      %s35 = sphi 0, %s32
      %s36 = sphi 0, %s35
      %s52 = sphi 0, %s36
      %s58 = sphi 0, %s60
      %s61 = sphi 0, %s58
      %s62 = sphi 0, %s61
      %s78 = sphi 0, %s62
      %s82 = sphi 0, %s82
      %s84 = sphi 0, %s82
      %s85 = sphi 0, %s84
      %s99 = sphi 0, %s85
      %s103 = sphi 0, %s103
      %s105 = sphi 0, %s103
      %s106 = sphi 0, %s105
      %s120 = sphi 0, %s106
      %s124 = sphi 0, %s124
      %s126 = sphi 0, %s124
      %s127 = sphi 0, %s126
      %s141 = sphi 0, %s127
      %s145 = sphi 0, %s145
      %s147 = sphi 0, %s145
      %s148 = sphi 0, %s147
      %s162 = sphi 0, %s148
      %s166 = sphi 0, %s166
      %s168 = sphi 0, %s166
      %s169 = sphi 0, %s168
      %s183 = sphi 0, %s169
      %s187 = sphi 0, %s187
      %s189 = sphi 0, %s187
      %s190 = sphi 0, %s189
      %s204 = sphi 0, %s190
      %s208 = sphi 0, %s208
      %s210 = sphi 0, %s208
      %s211 = sphi 0, %s210
      %s225 = sphi 0, %s211
      %s229 = sphi 0, %s229
      %s231 = sphi 0, %s229
      %s232 = sphi 0, %s231
      %s246 = sphi 0, %s232
      %s250 = sphi 0, %s250
      %s252 = sphi 0, %s250
      %s253 = sphi 0, %s252
      %s267 = sphi 0, %s253
      %s271 = sphi 0, %s271
      %s273 = sphi 0, %s271
      %s274 = sphi 0, %s273
      %s288 = sphi 0, %s274
      %s294 = sphi 0, %s296
      %s297 = sphi 0, %s294
      %s298 = sphi 0, %s297
      %s314 = sphi 0, %s298
      %s320 = sphi 0, %s322
      %s323 = sphi 0, %s320
      %s324 = sphi 0, %s323
      %s340 = sphi 0, %s324
    $region4: #{tpu_custom_call.1} parent=1 // loop_header_branch
      %25 = sbr.rel (%p23) target = $region8
    $region5: #{tpu_custom_call.1} parent=1 // loop_body
      %s27 = ssub.s32 %s22, 1
      %s28 = ssub.s32 %s22, 2
      %s29 = sadd.s32 %s22, 1
      %s30 = ssub.s32 %s22, %s29
      %p31 = scmp.eq.s32.totalorder %s30, 0
      %s33 = sadd.s32 %s32, 1
      %s34 = scalar_select %p31, %s32, %s33
      %p37 = pneg %p31
      %p38 = scmp.eq.s32.totalorder %s22, 3
      %p39 = por %p37, %p38
      %p40 = scmp.ne.s32.totalorder %s32, %s35
      %p41 = scmp.eq.s32.totalorder %s22, 0
      %p42 = por %p40, %p41
      %p43 = scmp.ne.s32.totalorder %s32, %s35
      %p44 = scmp.eq.s32.totalorder %s27, 3
      %p45 = por %p43, %p44
      %p46 = scmp.ne.s32.totalorder %s35, %s36
      %p47 = scmp.eq.s32.totalorder %s27, 0
      %p48 = por %p46, %p47
      %p49 = scmp.ne.s32.totalorder %s35, %s36
      %p50 = scmp.eq.s32.totalorder %s28, 3
      %p51 = por %p49, %p50
      %p53 = scmp.ne.s32.totalorder %s36, %s52
      %p54 = scmp.eq.s32.totalorder %s28, 0
      %p55 = por %p53, %p54
      %s56 = ssub.s32 %s22, %s29
      %p57 = scmp.eq.s32.totalorder %s56, 0
      %s59 = sadd.s32 %s58, 1
      %s60 = scalar_select %p57, %s58, %s59
      %p63 = pneg %p57
      %p64 = scmp.eq.s32.totalorder %s22, 3
      %p65 = por %p63, %p64
      %p66 = scmp.ne.s32.totalorder %s58, %s61
      %p67 = scmp.eq.s32.totalorder %s22, 0
      %p68 = por %p66, %p67
      %p69 = scmp.ne.s32.totalorder %s58, %s61
      %p70 = scmp.eq.s32.totalorder %s27, 3
      %p71 = por %p69, %p70
      %p72 = scmp.ne.s32.totalorder %s61, %s62
      %p73 = scmp.eq.s32.totalorder %s27, 0
      %p74 = por %p72, %p73
      %p75 = scmp.ne.s32.totalorder %s61, %s62
      %p76 = scmp.eq.s32.totalorder %s28, 3
      %p77 = por %p75, %p76
      %p79 = scmp.ne.s32.totalorder %s62, %s78
      %p80 = scmp.eq.s32.totalorder %s28, 0
      %p81 = por %p79, %p80
      %s83 = sadd.s32 %s82, 1
      %p86 = scmp.eq.s32.totalorder %s22, 3
      %p87 = scmp.ne.s32.totalorder %s82, %s84
      %p88 = scmp.eq.s32.totalorder %s22, 0
      %p89 = por %p87, %p88
      %p90 = scmp.ne.s32.totalorder %s82, %s84
      %p91 = scmp.eq.s32.totalorder %s27, 3
      %p92 = por %p90, %p91
      %p93 = scmp.ne.s32.totalorder %s84, %s85
      %p94 = scmp.eq.s32.totalorder %s27, 0
      %p95 = por %p93, %p94
      %p96 = scmp.ne.s32.totalorder %s84, %s85
      %p97 = scmp.eq.s32.totalorder %s28, 3
      %p98 = por %p96, %p97
      %p100 = scmp.ne.s32.totalorder %s85, %s99
      %p101 = scmp.eq.s32.totalorder %s28, 0
      %p102 = por %p100, %p101
      %s104 = sadd.s32 %s103, 1
      %p107 = scmp.eq.s32.totalorder %s22, 3
      %p108 = scmp.ne.s32.totalorder %s103, %s105
      %p109 = scmp.eq.s32.totalorder %s22, 0
      %p110 = por %p108, %p109
      %p111 = scmp.ne.s32.totalorder %s103, %s105
      %p112 = scmp.eq.s32.totalorder %s27, 3
      %p113 = por %p111, %p112
      %p114 = scmp.ne.s32.totalorder %s105, %s106
      %p115 = scmp.eq.s32.totalorder %s27, 0
      %p116 = por %p114, %p115
      %p117 = scmp.ne.s32.totalorder %s105, %s106
      %p118 = scmp.eq.s32.totalorder %s28, 3
      %p119 = por %p117, %p118
      %p121 = scmp.ne.s32.totalorder %s106, %s120
      %p122 = scmp.eq.s32.totalorder %s28, 0
      %p123 = por %p121, %p122
      %s125 = sadd.s32 %s124, 1
      %p128 = scmp.eq.s32.totalorder %s22, 3
      %p129 = scmp.ne.s32.totalorder %s124, %s126
      %p130 = scmp.eq.s32.totalorder %s22, 0
      %p131 = por %p129, %p130
      %p132 = scmp.ne.s32.totalorder %s124, %s126
      %p133 = scmp.eq.s32.totalorder %s27, 3
      %p134 = por %p132, %p133
      %p135 = scmp.ne.s32.totalorder %s126, %s127
      %p136 = scmp.eq.s32.totalorder %s27, 0
      %p137 = por %p135, %p136
      %p138 = scmp.ne.s32.totalorder %s126, %s127
      %p139 = scmp.eq.s32.totalorder %s28, 3
      %p140 = por %p138, %p139
      %p142 = scmp.ne.s32.totalorder %s127, %s141
      %p143 = scmp.eq.s32.totalorder %s28, 0
      %p144 = por %p142, %p143
      %s146 = sadd.s32 %s145, 1
      %p149 = scmp.eq.s32.totalorder %s22, 3
      %p150 = scmp.ne.s32.totalorder %s145, %s147
      %p151 = scmp.eq.s32.totalorder %s22, 0
      %p152 = por %p150, %p151
      %p153 = scmp.ne.s32.totalorder %s145, %s147
      %p154 = scmp.eq.s32.totalorder %s27, 3
      %p155 = por %p153, %p154
      %p156 = scmp.ne.s32.totalorder %s147, %s148
      %p157 = scmp.eq.s32.totalorder %s27, 0
      %p158 = por %p156, %p157
      %p159 = scmp.ne.s32.totalorder %s147, %s148
      %p160 = scmp.eq.s32.totalorder %s28, 3
      %p161 = por %p159, %p160
      %p163 = scmp.ne.s32.totalorder %s148, %s162
      %p164 = scmp.eq.s32.totalorder %s28, 0
      %p165 = por %p163, %p164
      %s167 = sadd.s32 %s166, 1
      %p170 = scmp.eq.s32.totalorder %s22, 3
      %p171 = scmp.ne.s32.totalorder %s166, %s168
      %p172 = scmp.eq.s32.totalorder %s22, 0
      %p173 = por %p171, %p172
      %p174 = scmp.ne.s32.totalorder %s166, %s168
      %p175 = scmp.eq.s32.totalorder %s27, 3
      %p176 = por %p174, %p175
      %p177 = scmp.ne.s32.totalorder %s168, %s169
      %p178 = scmp.eq.s32.totalorder %s27, 0
      %p179 = por %p177, %p178
      %p180 = scmp.ne.s32.totalorder %s168, %s169
      %p181 = scmp.eq.s32.totalorder %s28, 3
      %p182 = por %p180, %p181
      %p184 = scmp.ne.s32.totalorder %s169, %s183
      %p185 = scmp.eq.s32.totalorder %s28, 0
      %p186 = por %p184, %p185
      %s188 = sadd.s32 %s187, 1
      %p191 = scmp.eq.s32.totalorder %s22, 3
      %p192 = scmp.ne.s32.totalorder %s187, %s189
      %p193 = scmp.eq.s32.totalorder %s22, 0
      %p194 = por %p192, %p193
      %p195 = scmp.ne.s32.totalorder %s187, %s189
      %p196 = scmp.eq.s32.totalorder %s27, 3
      %p197 = por %p195, %p196
      %p198 = scmp.ne.s32.totalorder %s189, %s190
      %p199 = scmp.eq.s32.totalorder %s27, 0
      %p200 = por %p198, %p199
      %p201 = scmp.ne.s32.totalorder %s189, %s190
      %p202 = scmp.eq.s32.totalorder %s28, 3
      %p203 = por %p201, %p202
      %p205 = scmp.ne.s32.totalorder %s190, %s204
      %p206 = scmp.eq.s32.totalorder %s28, 0
      %p207 = por %p205, %p206
      %s209 = sadd.s32 %s208, 1
      %p212 = scmp.eq.s32.totalorder %s22, 3
      %p213 = scmp.ne.s32.totalorder %s208, %s210
      %p214 = scmp.eq.s32.totalorder %s22, 0
      %p215 = por %p213, %p214
      %p216 = scmp.ne.s32.totalorder %s208, %s210
      %p217 = scmp.eq.s32.totalorder %s27, 3
      %p218 = por %p216, %p217
      %p219 = scmp.ne.s32.totalorder %s210, %s211
      %p220 = scmp.eq.s32.totalorder %s27, 0
      %p221 = por %p219, %p220
      %p222 = scmp.ne.s32.totalorder %s210, %s211
      %p223 = scmp.eq.s32.totalorder %s28, 3
      %p224 = por %p222, %p223
      %p226 = scmp.ne.s32.totalorder %s211, %s225
      %p227 = scmp.eq.s32.totalorder %s28, 0
      %p228 = por %p226, %p227
      %s230 = sadd.s32 %s229, 1
      %p233 = scmp.eq.s32.totalorder %s22, 3
      %p234 = scmp.ne.s32.totalorder %s229, %s231
      %p235 = scmp.eq.s32.totalorder %s22, 0
      %p236 = por %p234, %p235
      %p237 = scmp.ne.s32.totalorder %s229, %s231
      %p238 = scmp.eq.s32.totalorder %s27, 3
      %p239 = por %p237, %p238
      %p240 = scmp.ne.s32.totalorder %s231, %s232
      %p241 = scmp.eq.s32.totalorder %s27, 0
      %p242 = por %p240, %p241
      %p243 = scmp.ne.s32.totalorder %s231, %s232
      %p244 = scmp.eq.s32.totalorder %s28, 3
      %p245 = por %p243, %p244
      %p247 = scmp.ne.s32.totalorder %s232, %s246
      %p248 = scmp.eq.s32.totalorder %s28, 0
      %p249 = por %p247, %p248
      %s251 = sadd.s32 %s250, 1
      %p254 = scmp.eq.s32.totalorder %s22, 3
      %p255 = scmp.ne.s32.totalorder %s250, %s252
      %p256 = scmp.eq.s32.totalorder %s22, 0
      %p257 = por %p255, %p256
      %p258 = scmp.ne.s32.totalorder %s250, %s252
      %p259 = scmp.eq.s32.totalorder %s27, 3
      %p260 = por %p258, %p259
      %p261 = scmp.ne.s32.totalorder %s252, %s253
      %p262 = scmp.eq.s32.totalorder %s27, 0
      %p263 = por %p261, %p262
      %p264 = scmp.ne.s32.totalorder %s252, %s253
      %p265 = scmp.eq.s32.totalorder %s28, 3
      %p266 = por %p264, %p265
      %p268 = scmp.ne.s32.totalorder %s253, %s267
      %p269 = scmp.eq.s32.totalorder %s28, 0
      %p270 = por %p268, %p269
      %s272 = sadd.s32 %s271, 1
      %p275 = scmp.eq.s32.totalorder %s22, 3
      %p276 = scmp.ne.s32.totalorder %s271, %s273
      %p277 = scmp.eq.s32.totalorder %s22, 0
      %p278 = por %p276, %p277
      %p279 = scmp.ne.s32.totalorder %s271, %s273
      %p280 = scmp.eq.s32.totalorder %s27, 3
      %p281 = por %p279, %p280
      %p282 = scmp.ne.s32.totalorder %s273, %s274
      %p283 = scmp.eq.s32.totalorder %s27, 0
      %p284 = por %p282, %p283
      %p285 = scmp.ne.s32.totalorder %s273, %s274
      %p286 = scmp.eq.s32.totalorder %s28, 3
      %p287 = por %p285, %p286
      %p289 = scmp.ne.s32.totalorder %s274, %s288
      %p290 = scmp.eq.s32.totalorder %s28, 0
      %p291 = por %p289, %p290
      %s292 = ssub.s32 %s22, %s29
      %p293 = scmp.eq.s32.totalorder %s292, 0
      %s295 = sadd.s32 %s294, 1
      %s296 = scalar_select %p293, %s294, %s295
      %p299 = pneg %p293
      %p300 = scmp.eq.s32.totalorder %s22, 3
      %p301 = por %p299, %p300
      %p302 = scmp.ne.s32.totalorder %s294, %s297
      %p303 = scmp.eq.s32.totalorder %s22, 0
      %p304 = por %p302, %p303
      %p305 = scmp.ne.s32.totalorder %s294, %s297
      %p306 = scmp.eq.s32.totalorder %s27, 3
      %p307 = por %p305, %p306
      %p308 = scmp.ne.s32.totalorder %s297, %s298
      %p309 = scmp.eq.s32.totalorder %s27, 0
      %p310 = por %p308, %p309
      %p311 = scmp.ne.s32.totalorder %s297, %s298
      %p312 = scmp.eq.s32.totalorder %s28, 3
      %p313 = por %p311, %p312
      %p315 = scmp.ne.s32.totalorder %s298, %s314
      %p316 = scmp.eq.s32.totalorder %s28, 0
      %p317 = por %p315, %p316
      %s318 = ssub.s32 %s22, %s29
      %p319 = scmp.eq.s32.totalorder %s318, 0
      %s321 = sadd.s32 %s320, 1
      %s322 = scalar_select %p319, %s320, %s321
      %p325 = pneg %p319
      %p326 = scmp.eq.s32.totalorder %s22, 3
      %p327 = por %p325, %p326
      %p328 = scmp.ne.s32.totalorder %s320, %s323
      %p329 = scmp.eq.s32.totalorder %s22, 0
      %p330 = por %p328, %p329
      %p331 = scmp.ne.s32.totalorder %s320, %s323
      %p332 = scmp.eq.s32.totalorder %s27, 3
      %p333 = por %p331, %p332
      %p334 = scmp.ne.s32.totalorder %s323, %s324
      %p335 = scmp.eq.s32.totalorder %s27, 0
      %p336 = por %p334, %p335
      %p337 = scmp.ne.s32.totalorder %s323, %s324
      %p338 = scmp.eq.s32.totalorder %s28, 3
      %p339 = por %p337, %p338
      %p341 = scmp.ne.s32.totalorder %s324, %s340
      %p342 = scmp.eq.s32.totalorder %s28, 0
      %p343 = por %p341, %p342
      %p344 = scmp.le.s32.totalorder 1, %s22
      %p345 = scmp.lt.s32.totalorder %s22, 5
      %p346 = pnand %p344, %p345
      %p347 = pneg %p346
      // Predicated region
      $region9: #{tpu_custom_call.1} parent=5 // pred_check
        _
      $region10: #{tpu_custom_call.1} parent=5 // pred_check_branch
        %349 = sbr.rel (%p346) target = $region12
      $region11: #{tpu_custom_call.1} parent=5 // pred_region
        %s350 = ssub.s32 %s22, 1
        // Predicated region
        $region13: #{tpu_custom_call.1} parent=11 // pred_check
          %p351 = pneg %p95
        $region14: #{tpu_custom_call.1} parent=11 // pred_check_branch
          %353 = sbr.rel (%p351) target = $region16
        $region15: #{tpu_custom_call.1} parent=11 // pred_region
          _
        $region16: #{tpu_custom_call.1} parent=11 // pred_fallthru
          _
        // Predicated region
        $region17: #{tpu_custom_call.1} parent=11 // pred_check
          %p354 = pneg %p116
        $region18: #{tpu_custom_call.1} parent=11 // pred_check_branch
          %356 = sbr.rel (%p354) target = $region20
        $region19: #{tpu_custom_call.1} parent=11 // pred_region
          _
        $region20: #{tpu_custom_call.1} parent=11 // pred_fallthru
          _
        // Predicated region
        $region21: #{tpu_custom_call.1} parent=11 // pred_check
          %p357 = pneg %p137
        $region22: #{tpu_custom_call.1} parent=11 // pred_check_branch
          %359 = sbr.rel (%p357) target = $region24
        $region23: #{tpu_custom_call.1} parent=11 // pred_region
          _
        $region24: #{tpu_custom_call.1} parent=11 // pred_fallthru
          _
        // Predicated region
        $region25: #{tpu_custom_call.1} parent=11 // pred_check
          %p360 = pneg %p158
        $region26: #{tpu_custom_call.1} parent=11 // pred_check_branch
          %362 = sbr.rel (%p360) target = $region28
        $region27: #{tpu_custom_call.1} parent=11 // pred_region
          _
        $region28: #{tpu_custom_call.1} parent=11 // pred_fallthru
          _
        // Predicated region
        $region29: #{tpu_custom_call.1} parent=11 // pred_check
          %p363 = pneg %p179
        $region30: #{tpu_custom_call.1} parent=11 // pred_check_branch
          %365 = sbr.rel (%p363) target = $region32
        $region31: #{tpu_custom_call.1} parent=11 // pred_region
          _
        $region32: #{tpu_custom_call.1} parent=11 // pred_fallthru
          _
        // Predicated region
        $region33: #{tpu_custom_call.1} parent=11 // pred_check
          %p366 = pneg %p200
        $region34: #{tpu_custom_call.1} parent=11 // pred_check_branch
          %368 = sbr.rel (%p366) target = $region36
        $region35: #{tpu_custom_call.1} parent=11 // pred_region
          _
        $region36: #{tpu_custom_call.1} parent=11 // pred_fallthru
          _
        // Predicated region
        $region37: #{tpu_custom_call.1} parent=11 // pred_check
          %p369 = pneg %p221
        $region38: #{tpu_custom_call.1} parent=11 // pred_check_branch
          %371 = sbr.rel (%p369) target = $region40
        $region39: #{tpu_custom_call.1} parent=11 // pred_region
          _
        $region40: #{tpu_custom_call.1} parent=11 // pred_fallthru
          _
        // Predicated region
        $region41: #{tpu_custom_call.1} parent=11 // pred_check
          %p372 = pneg %p242
        $region42: #{tpu_custom_call.1} parent=11 // pred_check_branch
          %374 = sbr.rel (%p372) target = $region44
        $region43: #{tpu_custom_call.1} parent=11 // pred_region
          _
        $region44: #{tpu_custom_call.1} parent=11 // pred_fallthru
          _
        // Predicated region
        $region45: #{tpu_custom_call.1} parent=11 // pred_check
          %p375 = pneg %p263
        $region46: #{tpu_custom_call.1} parent=11 // pred_check_branch
          %377 = sbr.rel (%p375) target = $region48
        $region47: #{tpu_custom_call.1} parent=11 // pred_region
          _
        $region48: #{tpu_custom_call.1} parent=11 // pred_fallthru
          _
        // Predicated region
        $region49: #{tpu_custom_call.1} parent=11 // pred_check
          %p378 = pneg %p284
        $region50: #{tpu_custom_call.1} parent=11 // pred_check_branch
          %380 = sbr.rel (%p378) target = $region52
        $region51: #{tpu_custom_call.1} parent=11 // pred_region
          _
        $region52: #{tpu_custom_call.1} parent=11 // pred_fallthru
          _
      $region12: #{tpu_custom_call.1} parent=5 // pred_fallthru
        _
      %p381 = scmp.lt.s32.totalorder %s22, 4
      // Predicated region
      $region53: #{tpu_custom_call.1} parent=5 // pred_check
        %p382 = pneg %p381
      $region54: #{tpu_custom_call.1} parent=5 // pred_check_branch
        %384 = sbr.rel (%p382) target = $region56
      $region55: #{tpu_custom_call.1} parent=5 // pred_region
        // Predicated region
        $region57: #{tpu_custom_call.1} parent=55 // pred_check
          %p385 = pneg %p42
        $region58: #{tpu_custom_call.1} parent=55 // pred_check_branch
          %387 = sbr.rel (%p385) target = $region60
        $region59: #{tpu_custom_call.1} parent=55 // pred_region
          %p388 = scmp.lt.s32.totalorder %s22, 3
          %s389 = scalar_select %p388, %s22, 3
          %s390 = smul.addr %s389, 8
          %s391 = smul.addr %s390, 4
          %s392 = scalar_lea.vmem %s0, %s391
        $region60: #{tpu_custom_call.1} parent=55 // pred_fallthru
          _
        // Predicated region
        $region61: #{tpu_custom_call.1} parent=55 // pred_check
          %p393 = pneg %p68
        $region62: #{tpu_custom_call.1} parent=55 // pred_check_branch
          %395 = sbr.rel (%p393) target = $region64
        $region63: #{tpu_custom_call.1} parent=55 // pred_region
          %p396 = scmp.lt.s32.totalorder %s22, 3
          %s397 = scalar_select %p396, %s22, 3
          %s398 = smul.addr %s397, 8
          %s399 = smul.addr %s398, 4
          %s400 = scalar_lea.vmem %s1, %s399
        $region64: #{tpu_custom_call.1} parent=55 // pred_fallthru
          _
        // Predicated region
        $region65: #{tpu_custom_call.1} parent=55 // pred_check
          %p401 = pneg %p304
        $region66: #{tpu_custom_call.1} parent=55 // pred_check_branch
          %403 = sbr.rel (%p401) target = $region68
        $region67: #{tpu_custom_call.1} parent=55 // pred_region
          %p404 = scmp.lt.s32.totalorder %s22, 3
          %s405 = scalar_select %p404, %s22, 3
          %s406 = smul.addr %s405, 8
          %s407 = smul.addr %s406, 8
          %s408 = scalar_lea.vmem %s12, %s407
        $region68: #{tpu_custom_call.1} parent=55 // pred_fallthru
          _
      $region56: #{tpu_custom_call.1} parent=5 // pred_fallthru
        _
      %p409 = scmp.le.s32.totalorder 1, %s22
      %p410 = scmp.lt.s32.totalorder %s22, 5
      %p411 = pnand %p409, %p410
      %p412 = pneg %p411
      // Predicated region
      $region69: #{tpu_custom_call.1} parent=5 // pred_check
        _
      $region70: #{tpu_custom_call.1} parent=5 // pred_check_branch
        %414 = sbr.rel (%p411) target = $region72
      $region71: #{tpu_custom_call.1} parent=5 // pred_region
        %s415 = ssub.s32 %s22, 1
        %p416 = scmp.lt.s32.totalorder %s27, 3
        %s417 = scalar_select %p416, %s27, 3
        %s418 = smul.addr %s417, 8
        %s419 = smul.addr %s418, 4
        %s420 = scalar_lea.vmem %s0, %s419
        %p421 = pneg %p48
        %p422 = pneg %p45
        %p423 = scmp.lt.s32.totalorder %s27, 3
        %s424 = scalar_select %p423, %s27, 3
        %s425 = smul.addr %s424, 8
        %s426 = smul.addr %s425, 4
        %s427 = scalar_lea.vmem %s1, %s426
        %p428 = pneg %p74
        %p429 = pneg %p71
        %p430 = pneg %p95
        %p431 = pneg %p92
        %p432 = pneg %p116
        %p433 = pneg %p113
        %p434 = pneg %p137
        %p435 = pneg %p134
        %p436 = pneg %p158
        %p437 = pneg %p155
        %p438 = pneg %p179
        %p439 = pneg %p176
        %p440 = pneg %p200
        %p441 = pneg %p197
        %p442 = pneg %p221
        %p443 = pneg %p218
        %p444 = pneg %p242
        %p445 = pneg %p239
        %p446 = pneg %p263
        %p447 = pneg %p260
        %p448 = pneg %p284
        %p449 = pneg %p281
        %p450 = scmp.lt.s32.totalorder %s27, 3
        %s451 = scalar_select %p450, %s27, 3
        %s452 = smul.addr %s451, 8
        %s453 = smul.addr %s452, 8
        %s454 = scalar_lea.vmem %s12, %s453
        %p455 = pneg %p310
        %p456 = pneg %p307
        %p457 = pneg %p336
        %p458 = pneg %p333
        %s459 = sand.u32 %s323, 1
        %s460 = scalar_lea.sflag [#allocation3], %s459
        %s461 = sand.u32 %s323, 1
        %s462 = smul.addr %s461, 64
        %s463 = scalar_lea.vmem [#allocation2], %s462
        %p464 = scmp.lt.s32.totalorder %s27, 3
        %s465 = scalar_select %p464, %s27, 3
        %s466 = smul.addr %s465, 8
        %s467 = smul.addr %s466, 4
        %s468 = scalar_lea.vmem %s0, %s467
        %p469 = scmp.lt.s32.totalorder %s27, 3
        %s470 = scalar_select %p469, %s27, 3
        %s471 = smul.addr %s470, 8
        %s472 = smul.addr %s471, 4
        %s473 = scalar_lea.vmem %s1, %s472
        %p474 = scmp.lt.s32.totalorder %s27, 3
        %s475 = scalar_select %p474, %s27, 3
        %s476 = smul.addr %s475, 8
        %s477 = smul.addr %s476, 8
        %s478 = scalar_lea.vmem %s12, %s477
        %v480 = vld [vmem:[%s468] sm:$0xf]
        %v481 = vld [vmem:[%s468 + $0x4] sm:$0xf]
        %v482 = vld [vmem:[%s468 + $0x8] sm:$0xf]
        %v483 = vld [vmem:[%s468 + $0xc] sm:$0xf]
        %v484 = vld [vmem:[%s468 + $0x10] sm:$0xf]
        %v485 = vld [vmem:[%s468 + $0x14] sm:$0xf]
        %v486 = vld [vmem:[%s468 + $0x18] sm:$0xf]
        %v487 = vld [vmem:[%s468 + $0x1c] sm:$0xf]
        %v488 = vld [vmem:[%s473] sm:$0xf]
        %v489 = vld [vmem:[%s473 + $0x4] sm:$0xf]
        %v490 = vld [vmem:[%s473 + $0x8] sm:$0xf]
        %v491 = vld [vmem:[%s473 + $0xc] sm:$0xf]
        %v492 = vld [vmem:[%s473 + $0x10] sm:$0xf]
        %v493 = vld [vmem:[%s473 + $0x14] sm:$0xf]
        %v494 = vld [vmem:[%s473 + $0x18] sm:$0xf]
        %v495 = vld [vmem:[%s473 + $0x1c] sm:$0xf]
        %v504 = vunpack.c.l.b16 %v480
        %v505 = vunpack.c.l.b16 %v481
        %v506 = vunpack.c.l.b16 %v482
        %v507 = vunpack.c.l.b16 %v483
        %v508 = vunpack.c.l.b16 %v484
        %v509 = vunpack.c.l.b16 %v485
        %v510 = vunpack.c.l.b16 %v486
        %v511 = vunpack.c.l.b16 %v487
        %v512 = vpack.c.b16 %v505, %v504
        %v513 = vpack.c.b16 %v507, %v506
        %v514 = vpack.c.b16 %v509, %v508
        %v515 = vpack.c.b16 %v511, %v510
        %v524 = vunpack.c.l.b16 %v488
        %v525 = vunpack.c.l.b16 %v489
        %v526 = vunpack.c.l.b16 %v490
        %v527 = vunpack.c.l.b16 %v491
        %v528 = vunpack.c.l.b16 %v492
        %v529 = vunpack.c.l.b16 %v493
        %v530 = vunpack.c.l.b16 %v494
        %v531 = vunpack.c.l.b16 %v495
        %v532 = vpack.c.b16 %v525, %v524
        %v533 = vpack.c.b16 %v527, %v526
        %v534 = vpack.c.b16 %v529, %v528
        %v535 = vpack.c.b16 %v531, %v530
        %vm540 = vcmask 523264
        %v542 = vsel %vm540, %v512, 0
        %v545 = vsel %vm540, %v513, 0
        %v548 = vsel %vm540, %v514, 0
        %v551 = vsel %vm540, %v515, 0
        %553 = vmatprep.subr.bf16.mxu0 0
        %554 = vmatpush1.bf16.msra.mxu0 0
        %555 = vmatprep.subr.bf16.mxu0 0
        %556 = vmatpush1.bf16.msra.mxu0 0
        %557 = vmatprep.subr.bf16.mxu0 0
        %558 = vmatpush1.bf16.msra.mxu0 0
        %559 = vmatprep.subr.bf16.mxu0 0
        %560 = vmatpush1.bf16.msra.mxu0 0
        %561 = vmatprep.subr.bf16.mxu0 0
        %562 = vmatpush1.bf16.msra.mxu0 %v535
        %563 = vmatprep.subr.bf16.mxu0 0
        %564 = vmatpush1.bf16.msra.mxu0 %v534
        %565 = vmatprep.subr.bf16.mxu0 0
        %566 = vmatpush1.bf16.msra.mxu0 %v533
        %567 = vmatprep.subr.bf16.mxu0 0
        %568 = vmatpush1.bf16.msra.mxu0 %v532
        %569 = vmatprep.subr.bf16.mxu0 0
        %570 = vmatpush2.bf16.msra.mxu0 0
        %571 = vmatprep.subr.bf16.mxu0 0
        %572 = vmatpush2.bf16.msra.mxu0 0
        %573 = vmatprep.subr.bf16.mxu0 0
        %574 = vmatpush2.bf16.msra.mxu0 0
        %575 = vmatprep.subr.bf16.mxu0 0
        %576 = vmatpush2.bf16.msra.mxu0 0
        %577 = vmatprep.subr.bf16.mxu0 0
        %578 = vmatpush2.bf16.msra.mxu0 0
        %579 = vmatprep.subr.bf16.mxu0 0
        %580 = vmatpush2.bf16.msra.mxu0 0
        %581 = vmatprep.subr.bf16.mxu0 0
        %582 = vmatpush2.bf16.msra.mxu0 0
        %583 = vmatprep.subr.bf16.mxu0 0
        %584 = vmatpush2.bf16.msra.mxu0 0
        %585 = vmatprep.mubr.bf16.mxu0 0
        %586 = vmatmul.mubr.bf16.gmra.mxu0 %v542
        %v587 = vpop.f32.mrf.mxu0
        %v588 = vadd.f32 0.0, %v587
        %v589 = vpop.f32.mrf.mxu0
        %v590 = vpop.f32.mrf.mxu0
        %v591 = vadd.f32 0.0, %v590
        %v592 = vpop.f32.mrf.mxu0
        %593 = vmatprep.mubr.bf16.mxu0 0
        %594 = vmatmul.mubr.bf16.gmra.mxu0 %v545
        %v595 = vpop.f32.mrf.mxu0
        %v596 = vadd.f32 0.0, %v595
        %v597 = vpop.f32.mrf.mxu0
        %v598 = vpop.f32.mrf.mxu0
        %v599 = vadd.f32 0.0, %v598
        %v600 = vpop.f32.mrf.mxu0
        %601 = vmatprep.mubr.bf16.mxu0 0
        %602 = vmatmul.mubr.bf16.gmra.mxu0 %v548
        %v603 = vpop.f32.mrf.mxu0
        %v604 = vadd.f32 0.0, %v603
        %v605 = vpop.f32.mrf.mxu0
        %v606 = vpop.f32.mrf.mxu0
        %v607 = vadd.f32 0.0, %v606
        %v608 = vpop.f32.mrf.mxu0
        %609 = vmatprep.mubr.bf16.mxu0 0
        %610 = vmatmul.mubr.bf16.gmra.mxu0 %v551
        %v611 = vpop.f32.mrf.mxu0
        %v612 = vadd.f32 0.0, %v611
        %v613 = vpop.f32.mrf.mxu0
        %v614 = vpop.f32.mrf.mxu0
        %v615 = vadd.f32 0.0, %v614
        %v616 = vpop.f32.mrf.mxu0
        %617 = vdwg.mxu0
        %v618 = vpack.c.bf16 %v591, %v588
        %v619 = vpack.c.bf16 %v599, %v596
        %v620 = vpack.c.bf16 %v607, %v604
        %v621 = vpack.c.bf16 %v615, %v612
        %v622 = vld [vmem:[%s2] sm:$0xf]
        %v623 = vld [vmem:[%s2 + $0x4] sm:$0xf]
        %v624 = vld [vmem:[%s3] sm:$0x1]
        %v626 = vlaneseq
        %v627 = vshrl.u32 %v626, 7
        %v628 = vsub.s32 0, %v627
        %v629 = vrot.slane %v624, %v628
        %v633 = vunpack.c.l.b16 %v622
        %v634 = vunpack.c.l.b16 %v623
        %v635 = vpack.c.b16 %v634, %v633
        %vm637 = vcmask 130048
        %v639 = vsel %vm637, %v618, 0
        %v642 = vsel %vm637, %v619, 0
        %v645 = vsel %vm637, %v620, 0
        %v648 = vsel %vm637, %v621, 0
        %650 = vmatprep.subr.bf16.mxu0 0
        %651 = vmatpush1.bf16.msra.mxu0 0
        %652 = vmatprep.subr.bf16.mxu0 0
        %653 = vmatpush1.bf16.msra.mxu0 0
        %654 = vmatprep.subr.bf16.mxu0 0
        %655 = vmatpush1.bf16.msra.mxu0 0
        %656 = vmatprep.subr.bf16.mxu0 0
        %657 = vmatpush1.bf16.msra.mxu0 0
        %658 = vmatprep.subr.bf16.mxu0 0
        %659 = vmatpush1.bf16.msra.mxu0 0
        %660 = vmatprep.subr.bf16.mxu0 0
        %661 = vmatpush1.bf16.msra.mxu0 0
        %662 = vmatprep.subr.bf16.mxu0 0
        %663 = vmatpush1.bf16.msra.mxu0 0
        %664 = vmatprep.subr.bf16.mxu0 0
        %665 = vmatpush1.bf16.msra.mxu0 %v635
        %666 = vmatprep.subr.bf16.mxu0 0
        %667 = vmatpush2.bf16.msra.mxu0 0
        %668 = vmatprep.subr.bf16.mxu0 0
        %669 = vmatpush2.bf16.msra.mxu0 0
        %670 = vmatprep.subr.bf16.mxu0 0
        %671 = vmatpush2.bf16.msra.mxu0 0
        %672 = vmatprep.subr.bf16.mxu0 0
        %673 = vmatpush2.bf16.msra.mxu0 0
        %674 = vmatprep.subr.bf16.mxu0 0
        %675 = vmatpush2.bf16.msra.mxu0 0
        %676 = vmatprep.subr.bf16.mxu0 0
        %677 = vmatpush2.bf16.msra.mxu0 0
        %678 = vmatprep.subr.bf16.mxu0 0
        %679 = vmatpush2.bf16.msra.mxu0 0
        %680 = vmatprep.subr.bf16.mxu0 0
        %681 = vmatpush2.bf16.msra.mxu0 0
        %682 = vmatprep.mubr.bf16.mxu0 0
        %683 = vmatmul.mubr.bf16.gmra.mxu0 %v639
        %v684 = vpop.f32.mrf.mxu0
        %v685 = vadd.f32 %v629, %v684
        %v686 = vpop.f32.mrf.mxu0
        %v687 = vpop.f32.mrf.mxu0
        %v688 = vadd.f32 %v629, %v687
        %v689 = vpop.f32.mrf.mxu0
        %690 = vmatprep.mubr.bf16.mxu0 0
        %691 = vmatmul.mubr.bf16.gmra.mxu0 %v642
        %v692 = vpop.f32.mrf.mxu0
        %v693 = vadd.f32 %v629, %v692
        %v694 = vpop.f32.mrf.mxu0
        %v695 = vpop.f32.mrf.mxu0
        %v696 = vadd.f32 %v629, %v695
        %v697 = vpop.f32.mrf.mxu0
        %698 = vmatprep.mubr.bf16.mxu0 0
        %699 = vmatmul.mubr.bf16.gmra.mxu0 %v645
        %v700 = vpop.f32.mrf.mxu0
        %v701 = vadd.f32 %v629, %v700
        %v702 = vpop.f32.mrf.mxu0
        %v703 = vpop.f32.mrf.mxu0
        %v704 = vadd.f32 %v629, %v703
        %v705 = vpop.f32.mrf.mxu0
        %706 = vmatprep.mubr.bf16.mxu0 0
        %707 = vmatmul.mubr.bf16.gmra.mxu0 %v648
        %v708 = vpop.f32.mrf.mxu0
        %v709 = vadd.f32 %v629, %v708
        %v710 = vpop.f32.mrf.mxu0
        %v711 = vpop.f32.mrf.mxu0
        %v712 = vadd.f32 %v629, %v711
        %v713 = vpop.f32.mrf.mxu0
        %714 = vdwg.mxu0
        %v715 = vmax.f32 %v685, 0.0
        %v716 = vmax.f32 %v688, 0.0
        %v717 = vmax.f32 %v693, 0.0
        %v718 = vmax.f32 %v696, 0.0
        %v719 = vmax.f32 %v701, 0.0
        %v720 = vmax.f32 %v704, 0.0
        %v721 = vmax.f32 %v709, 0.0
        %v722 = vmax.f32 %v712, 0.0
        %v723 = vpack.c.bf16 %v716, %v715
        %v724 = vpack.c.bf16 %v718, %v717
        %v725 = vpack.c.bf16 %v720, %v719
        %v726 = vpack.c.bf16 %v722, %v721
        %v727 = vld [vmem:[%s4] sm:$0xf]
        %v728 = vld [vmem:[%s4 + $0x4] sm:$0xf]
        %v729 = vld [vmem:[%s4 + $0x8] sm:$0xf]
        %v730 = vld [vmem:[%s4 + $0xc] sm:$0xf]
        %v731 = vld [vmem:[%s4 + $0x10] sm:$0xf]
        %v732 = vld [vmem:[%s4 + $0x14] sm:$0xf]
        %v733 = vld [vmem:[%s4 + $0x18] sm:$0xf]
        %v734 = vld [vmem:[%s4 + $0x1c] sm:$0xf]
        %v743 = vunpack.c.l.b16 %v727
        %v744 = vunpack.c.l.b16 %v728
        %v745 = vunpack.c.l.b16 %v729
        %v746 = vunpack.c.l.b16 %v730
        %v747 = vunpack.c.l.b16 %v731
        %v748 = vunpack.c.l.b16 %v732
        %v749 = vunpack.c.l.b16 %v733
        %v750 = vunpack.c.l.b16 %v734
        %v751 = vpack.c.b16 %v744, %v743
        %v752 = vpack.c.b16 %v746, %v745
        %v753 = vpack.c.b16 %v748, %v747
        %v754 = vpack.c.b16 %v750, %v749
        %v760 = vsel %vm540, %v723, 0
        %v763 = vsel %vm540, %v724, 0
        %v766 = vsel %vm540, %v725, 0
        %v769 = vsel %vm540, %v726, 0
        %771 = vmatprep.subr.bf16.mxu0 0
        %772 = vmatpush1.bf16.msra.mxu0 0
        %773 = vmatprep.subr.bf16.mxu0 0
        %774 = vmatpush1.bf16.msra.mxu0 0
        %775 = vmatprep.subr.bf16.mxu0 0
        %776 = vmatpush1.bf16.msra.mxu0 0
        %777 = vmatprep.subr.bf16.mxu0 0
        %778 = vmatpush1.bf16.msra.mxu0 0
        %779 = vmatprep.subr.bf16.mxu0 0
        %780 = vmatpush1.bf16.msra.mxu0 %v754
        %781 = vmatprep.subr.bf16.mxu0 0
        %782 = vmatpush1.bf16.msra.mxu0 %v753
        %783 = vmatprep.subr.bf16.mxu0 0
        %784 = vmatpush1.bf16.msra.mxu0 %v752
        %785 = vmatprep.subr.bf16.mxu0 0
        %786 = vmatpush1.bf16.msra.mxu0 %v751
        %787 = vmatprep.subr.bf16.mxu0 0
        %788 = vmatpush2.bf16.msra.mxu0 0
        %789 = vmatprep.subr.bf16.mxu0 0
        %790 = vmatpush2.bf16.msra.mxu0 0
        %791 = vmatprep.subr.bf16.mxu0 0
        %792 = vmatpush2.bf16.msra.mxu0 0
        %793 = vmatprep.subr.bf16.mxu0 0
        %794 = vmatpush2.bf16.msra.mxu0 0
        %795 = vmatprep.subr.bf16.mxu0 0
        %796 = vmatpush2.bf16.msra.mxu0 0
        %797 = vmatprep.subr.bf16.mxu0 0
        %798 = vmatpush2.bf16.msra.mxu0 0
        %799 = vmatprep.subr.bf16.mxu0 0
        %800 = vmatpush2.bf16.msra.mxu0 0
        %801 = vmatprep.subr.bf16.mxu0 0
        %802 = vmatpush2.bf16.msra.mxu0 0
        %803 = vmatprep.mubr.bf16.mxu0 0
        %804 = vmatmul.mubr.bf16.gmra.mxu0 %v760
        %v805 = vpop.f32.mrf.mxu0
        %v806 = vadd.f32 0.0, %v805
        %v807 = vpop.f32.mrf.mxu0
        %v808 = vpop.f32.mrf.mxu0
        %v809 = vadd.f32 0.0, %v808
        %v810 = vpop.f32.mrf.mxu0
        %811 = vmatprep.mubr.bf16.mxu0 0
        %812 = vmatmul.mubr.bf16.gmra.mxu0 %v763
        %v813 = vpop.f32.mrf.mxu0
        %v814 = vadd.f32 0.0, %v813
        %v815 = vpop.f32.mrf.mxu0
        %v816 = vpop.f32.mrf.mxu0
        %v817 = vadd.f32 0.0, %v816
        %v818 = vpop.f32.mrf.mxu0
        %819 = vmatprep.mubr.bf16.mxu0 0
        %820 = vmatmul.mubr.bf16.gmra.mxu0 %v766
        %v821 = vpop.f32.mrf.mxu0
        %v822 = vadd.f32 0.0, %v821
        %v823 = vpop.f32.mrf.mxu0
        %v824 = vpop.f32.mrf.mxu0
        %v825 = vadd.f32 0.0, %v824
        %v826 = vpop.f32.mrf.mxu0
        %827 = vmatprep.mubr.bf16.mxu0 0
        %828 = vmatmul.mubr.bf16.gmra.mxu0 %v769
        %v829 = vpop.f32.mrf.mxu0
        %v830 = vadd.f32 0.0, %v829
        %v831 = vpop.f32.mrf.mxu0
        %v832 = vpop.f32.mrf.mxu0
        %v833 = vadd.f32 0.0, %v832
        %v834 = vpop.f32.mrf.mxu0
        %835 = vdwg.mxu0
        %v836 = vpack.c.bf16 %v809, %v806
        %v837 = vpack.c.bf16 %v817, %v814
        %v838 = vpack.c.bf16 %v825, %v822
        %v839 = vpack.c.bf16 %v833, %v830
        %v840 = vld [vmem:[%s5] sm:$0x1]
        %v842 = vlaneseq
        %v843 = vshrl.u32 %v842, 7
        %v844 = vsub.s32 0, %v843
        %v845 = vrot.slane %v840, %v844
        %847 = vmatprep.subr.bf16.mxu0 0
        %848 = vmatpush1.bf16.msra.mxu0 0
        %849 = vmatprep.subr.bf16.mxu0 0
        %850 = vmatpush1.bf16.msra.mxu0 0
        %851 = vmatprep.subr.bf16.mxu0 0
        %852 = vmatpush1.bf16.msra.mxu0 0
        %853 = vmatprep.subr.bf16.mxu0 0
        %854 = vmatpush1.bf16.msra.mxu0 0
        %855 = vmatprep.subr.bf16.mxu0 0
        %856 = vmatpush1.bf16.msra.mxu0 %v839
        %857 = vmatprep.subr.bf16.mxu0 0
        %858 = vmatpush1.bf16.msra.mxu0 %v838
        %859 = vmatprep.subr.bf16.mxu0 0
        %860 = vmatpush1.bf16.msra.mxu0 %v837
        %861 = vmatprep.subr.bf16.mxu0 0
        %862 = vmatpush1.bf16.msra.mxu0 %v836
        %863 = vmatprep.subr.bf16.mxu0 0
        %864 = vmatpush2.bf16.msra.mxu0 0
        %865 = vmatprep.subr.bf16.mxu0 0
        %866 = vmatpush2.bf16.msra.mxu0 0
        %867 = vmatprep.subr.bf16.mxu0 0
        %868 = vmatpush2.bf16.msra.mxu0 0
        %869 = vmatprep.subr.bf16.mxu0 0
        %870 = vmatpush2.bf16.msra.mxu0 0
        %871 = vmatprep.subr.bf16.mxu0 0
        %872 = vmatpush2.bf16.msra.mxu0 0
        %873 = vmatprep.subr.bf16.mxu0 0
        %874 = vmatpush2.bf16.msra.mxu0 0
        %875 = vmatprep.subr.bf16.mxu0 0
        %876 = vmatpush2.bf16.msra.mxu0 0
        %877 = vmatprep.subr.bf16.mxu0 0
        %878 = vmatpush2.bf16.msra.mxu0 0
        %879 = vmatprep.mubr.bf16.mxu0 0
        %880 = vmatmul.mubr.bf16.gmra.mxu0 %v542
        %v881 = vpop.f32.mrf.mxu0
        %v882 = vadd.f32 %v845, %v881
        %v883 = vpop.f32.mrf.mxu0
        %v884 = vpop.f32.mrf.mxu0
        %v885 = vadd.f32 %v845, %v884
        %v886 = vpop.f32.mrf.mxu0
        %887 = vmatprep.mubr.bf16.mxu0 0
        %888 = vmatmul.mubr.bf16.gmra.mxu0 %v545
        %v889 = vpop.f32.mrf.mxu0
        %v890 = vadd.f32 %v845, %v889
        %v891 = vpop.f32.mrf.mxu0
        %v892 = vpop.f32.mrf.mxu0
        %v893 = vadd.f32 %v845, %v892
        %v894 = vpop.f32.mrf.mxu0
        %895 = vmatprep.mubr.bf16.mxu0 0
        %896 = vmatmul.mubr.bf16.gmra.mxu0 %v548
        %v897 = vpop.f32.mrf.mxu0
        %v898 = vadd.f32 %v845, %v897
        %v899 = vpop.f32.mrf.mxu0
        %v900 = vpop.f32.mrf.mxu0
        %v901 = vadd.f32 %v845, %v900
        %v902 = vpop.f32.mrf.mxu0
        %903 = vmatprep.mubr.bf16.mxu0 0
        %904 = vmatmul.mubr.bf16.gmra.mxu0 %v551
        %v905 = vpop.f32.mrf.mxu0
        %v906 = vadd.f32 %v845, %v905
        %v907 = vpop.f32.mrf.mxu0
        %v908 = vpop.f32.mrf.mxu0
        %v909 = vadd.f32 %v845, %v908
        %v910 = vpop.f32.mrf.mxu0
        %911 = vdwg.mxu0
        %v912 = vmax.f32 %v882, 0.0
        %v913 = vmax.f32 %v885, 0.0
        %v914 = vmax.f32 %v890, 0.0
        %v915 = vmax.f32 %v893, 0.0
        %v916 = vmax.f32 %v898, 0.0
        %v917 = vmax.f32 %v901, 0.0
        %v918 = vmax.f32 %v906, 0.0
        %v919 = vmax.f32 %v909, 0.0
        %v920 = vpack.c.bf16 %v913, %v912
        %v921 = vpack.c.bf16 %v915, %v914
        %v922 = vpack.c.bf16 %v917, %v916
        %v923 = vpack.c.bf16 %v919, %v918
        %v924 = vld [vmem:[%s6] sm:$0xf]
        %v925 = vld [vmem:[%s6 + $0x4] sm:$0xf]
        %v926 = vld [vmem:[%s6 + $0x8] sm:$0xf]
        %v927 = vld [vmem:[%s6 + $0xc] sm:$0xf]
        %v928 = vld [vmem:[%s6 + $0x10] sm:$0xf]
        %v929 = vld [vmem:[%s6 + $0x14] sm:$0xf]
        %v930 = vld [vmem:[%s6 + $0x18] sm:$0xf]
        %v931 = vld [vmem:[%s6 + $0x1c] sm:$0xf]
        %v932 = vld [vmem:[%s7] sm:$0x1]
        %v934 = vlaneseq
        %v935 = vshrl.u32 %v934, 7
        %v936 = vsub.s32 0, %v935
        %v937 = vrot.slane %v932, %v936
        %v947 = vunpack.c.l.b16 %v924
        %v948 = vunpack.c.l.b16 %v925
        %v949 = vunpack.c.l.b16 %v926
        %v950 = vunpack.c.l.b16 %v927
        %v951 = vunpack.c.l.b16 %v928
        %v952 = vunpack.c.l.b16 %v929
        %v953 = vunpack.c.l.b16 %v930
        %v954 = vunpack.c.l.b16 %v931
        %v955 = vpack.c.b16 %v948, %v947
        %v956 = vpack.c.b16 %v950, %v949
        %v957 = vpack.c.b16 %v952, %v951
        %v958 = vpack.c.b16 %v954, %v953
        %v964 = vsel %vm540, %v920, 0
        %v967 = vsel %vm540, %v921, 0
        %v970 = vsel %vm540, %v922, 0
        %v973 = vsel %vm540, %v923, 0
        %975 = vmatprep.subr.bf16.mxu0 0
        %976 = vmatpush1.bf16.msra.mxu0 0
        %977 = vmatprep.subr.bf16.mxu0 0
        %978 = vmatpush1.bf16.msra.mxu0 0
        %979 = vmatprep.subr.bf16.mxu0 0
        %980 = vmatpush1.bf16.msra.mxu0 0
        %981 = vmatprep.subr.bf16.mxu0 0
        %982 = vmatpush1.bf16.msra.mxu0 0
        %983 = vmatprep.subr.bf16.mxu0 0
        %984 = vmatpush1.bf16.msra.mxu0 %v958
        %985 = vmatprep.subr.bf16.mxu0 0
        %986 = vmatpush1.bf16.msra.mxu0 %v957
        %987 = vmatprep.subr.bf16.mxu0 0
        %988 = vmatpush1.bf16.msra.mxu0 %v956
        %989 = vmatprep.subr.bf16.mxu0 0
        %990 = vmatpush1.bf16.msra.mxu0 %v955
        %991 = vmatprep.subr.bf16.mxu0 0
        %992 = vmatpush2.bf16.msra.mxu0 0
        %993 = vmatprep.subr.bf16.mxu0 0
        %994 = vmatpush2.bf16.msra.mxu0 0
        %995 = vmatprep.subr.bf16.mxu0 0
        %996 = vmatpush2.bf16.msra.mxu0 0
        %997 = vmatprep.subr.bf16.mxu0 0
        %998 = vmatpush2.bf16.msra.mxu0 0
        %999 = vmatprep.subr.bf16.mxu0 0
        %1000 = vmatpush2.bf16.msra.mxu0 0
        %1001 = vmatprep.subr.bf16.mxu0 0
        %1002 = vmatpush2.bf16.msra.mxu0 0
        %1003 = vmatprep.subr.bf16.mxu0 0
        %1004 = vmatpush2.bf16.msra.mxu0 0
        %1005 = vmatprep.subr.bf16.mxu0 0
        %1006 = vmatpush2.bf16.msra.mxu0 0
        %1007 = vmatprep.mubr.bf16.mxu0 0
        %1008 = vmatmul.mubr.bf16.gmra.mxu0 %v964
        %v1009 = vpop.f32.mrf.mxu0
        %v1010 = vadd.f32 %v937, %v1009
        %v1011 = vpop.f32.mrf.mxu0
        %v1012 = vpop.f32.mrf.mxu0
        %v1013 = vadd.f32 %v937, %v1012
        %v1014 = vpop.f32.mrf.mxu0
        %1015 = vmatprep.mubr.bf16.mxu0 0
        %1016 = vmatmul.mubr.bf16.gmra.mxu0 %v967
        %v1017 = vpop.f32.mrf.mxu0
        %v1018 = vadd.f32 %v937, %v1017
        %v1019 = vpop.f32.mrf.mxu0
        %v1020 = vpop.f32.mrf.mxu0
        %v1021 = vadd.f32 %v937, %v1020
        %v1022 = vpop.f32.mrf.mxu0
        %1023 = vmatprep.mubr.bf16.mxu0 0
        %1024 = vmatmul.mubr.bf16.gmra.mxu0 %v970
        %v1025 = vpop.f32.mrf.mxu0
        %v1026 = vadd.f32 %v937, %v1025
        %v1027 = vpop.f32.mrf.mxu0
        %v1028 = vpop.f32.mrf.mxu0
        %v1029 = vadd.f32 %v937, %v1028
        %v1030 = vpop.f32.mrf.mxu0
        %1031 = vmatprep.mubr.bf16.mxu0 0
        %1032 = vmatmul.mubr.bf16.gmra.mxu0 %v973
        %v1033 = vpop.f32.mrf.mxu0
        %v1034 = vadd.f32 %v937, %v1033
        %v1035 = vpop.f32.mrf.mxu0
        %v1036 = vpop.f32.mrf.mxu0
        %v1037 = vadd.f32 %v937, %v1036
        %v1038 = vpop.f32.mrf.mxu0
        %1039 = vdwg.mxu0
        %v1040 = vld [vmem:[%s478] sm:$0xff]
        %v1041 = vld [vmem:[%s478 + $0x8] sm:$0xff]
        %v1042 = vld [vmem:[%s478 + $0x10] sm:$0xff]
        %v1043 = vld [vmem:[%s478 + $0x18] sm:$0xff]
        %v1044 = vld [vmem:[%s478 + $0x20] sm:$0xff]
        %v1045 = vld [vmem:[%s478 + $0x28] sm:$0xff]
        %v1046 = vld [vmem:[%s478 + $0x30] sm:$0xff]
        %v1047 = vld [vmem:[%s478 + $0x38] sm:$0xff]
        %v1048 = vmul.f32 %v1010, 0.5
        %v1049 = vmul.f32 %v1013, 0.5
        %v1050 = vmul.f32 %v1018, 0.5
        %v1051 = vmul.f32 %v1021, 0.5
        %v1052 = vmul.f32 %v1026, 0.5
        %v1053 = vmul.f32 %v1029, 0.5
        %v1054 = vmul.f32 %v1034, 0.5
        %v1055 = vmul.f32 %v1037, 0.5
        %v1056 = vmul.f32 %v1048, 1.442695
        %v1057 = vpow.pop %v1056
        %v1058 = vmul.f32 %v1049, 1.442695
        %v1059 = vpow.pop %v1058
        %v1060 = vmul.f32 %v1050, 1.442695
        %v1061 = vpow.pop %v1060
        %v1062 = vmul.f32 %v1051, 1.442695
        %v1063 = vpow.pop %v1062
        %v1064 = vmul.f32 %v1052, 1.442695
        %v1065 = vpow.pop %v1064
        %v1066 = vmul.f32 %v1053, 1.442695
        %v1067 = vpow.pop %v1066
        %v1068 = vmul.f32 %v1054, 1.442695
        %v1069 = vpow.pop %v1068
        %v1070 = vmul.f32 %v1055, 1.442695
        %v1071 = vpow.pop %v1070
        %1080 = vrot.lane.b32.xlu0 %v1057, 112
        %v1081 = vpop.permute.xlu0 %1080
        %1082 = vrot.lane.b32.xlu0 %v1059, 112
        %v1083 = vpop.permute.xlu0 %1082
        %1084 = vrot.lane.b32.xlu0 %v1061, 112
        %v1085 = vpop.permute.xlu0 %1084
        %1086 = vrot.lane.b32.xlu0 %v1063, 112
        %v1087 = vpop.permute.xlu0 %1086
        %1088 = vrot.lane.b32.xlu0 %v1065, 112
        %v1089 = vpop.permute.xlu0 %1088
        %1090 = vrot.lane.b32.xlu0 %v1067, 112
        %v1091 = vpop.permute.xlu0 %1090
        %1092 = vrot.lane.b32.xlu0 %v1069, 112
        %v1093 = vpop.permute.xlu0 %1092
        %1094 = vrot.lane.b32.xlu0 %v1071, 112
        %v1095 = vpop.permute.xlu0 %1094
        %v1104 = vmul.f32 %v1040, %v1081
        %v1105 = vmul.f32 %v1041, %v1083
        %v1106 = vmul.f32 %v1042, %v1085
        %v1107 = vmul.f32 %v1043, %v1087
        %v1108 = vmul.f32 %v1044, %v1089
        %v1109 = vmul.f32 %v1045, %v1091
        %v1110 = vmul.f32 %v1046, %v1093
        %v1111 = vmul.f32 %v1047, %v1095
        %v1112 = vadd.f32 %v1010, %v1104
        %v1113 = vadd.f32 %v1013, %v1105
        %v1114 = vadd.f32 %v1018, %v1106
        %v1115 = vadd.f32 %v1021, %v1107
        %v1116 = vadd.f32 %v1026, %v1108
        %v1117 = vadd.f32 %v1029, %v1109
        %v1118 = vadd.f32 %v1034, %v1110
        %v1119 = vadd.f32 %v1037, %v1111
        %v1120 = vpack.c.bf16 %v1113, %v1112
        %v1121 = vpack.c.bf16 %v1115, %v1114
        %v1122 = vpack.c.bf16 %v1117, %v1116
        %v1123 = vpack.c.bf16 %v1119, %v1118
        %v1124 = vld [vmem:[%s8] sm:$0xf]
        %v1125 = vld [vmem:[%s8 + $0x4] sm:$0xf]
        %v1126 = vld [vmem:[%s9] sm:$0x1]
        %v1128 = vlaneseq
        %v1129 = vshrl.u32 %v1128, 7
        %v1130 = vsub.s32 0, %v1129
        %v1131 = vrot.slane %v1126, %v1130
        %v1135 = vunpack.c.l.b16 %v1124
        %v1136 = vunpack.c.l.b16 %v1125
        %v1137 = vpack.c.b16 %v1136, %v1135
        %v1140 = vsel %vm637, %v1120, 0
        %v1143 = vsel %vm637, %v1121, 0
        %v1146 = vsel %vm637, %v1122, 0
        %v1149 = vsel %vm637, %v1123, 0
        %1151 = vmatprep.subr.bf16.mxu0 0
        %1152 = vmatpush1.bf16.msra.mxu0 0
        %1153 = vmatprep.subr.bf16.mxu0 0
        %1154 = vmatpush1.bf16.msra.mxu0 0
        %1155 = vmatprep.subr.bf16.mxu0 0
        %1156 = vmatpush1.bf16.msra.mxu0 0
        %1157 = vmatprep.subr.bf16.mxu0 0
        %1158 = vmatpush1.bf16.msra.mxu0 0
        %1159 = vmatprep.subr.bf16.mxu0 0
        %1160 = vmatpush1.bf16.msra.mxu0 0
        %1161 = vmatprep.subr.bf16.mxu0 0
        %1162 = vmatpush1.bf16.msra.mxu0 0
        %1163 = vmatprep.subr.bf16.mxu0 0
        %1164 = vmatpush1.bf16.msra.mxu0 0
        %1165 = vmatprep.subr.bf16.mxu0 0
        %1166 = vmatpush1.bf16.msra.mxu0 %v1137
        %1167 = vmatprep.subr.bf16.mxu0 0
        %1168 = vmatpush2.bf16.msra.mxu0 0
        %1169 = vmatprep.subr.bf16.mxu0 0
        %1170 = vmatpush2.bf16.msra.mxu0 0
        %1171 = vmatprep.subr.bf16.mxu0 0
        %1172 = vmatpush2.bf16.msra.mxu0 0
        %1173 = vmatprep.subr.bf16.mxu0 0
        %1174 = vmatpush2.bf16.msra.mxu0 0
        %1175 = vmatprep.subr.bf16.mxu0 0
        %1176 = vmatpush2.bf16.msra.mxu0 0
        %1177 = vmatprep.subr.bf16.mxu0 0
        %1178 = vmatpush2.bf16.msra.mxu0 0
        %1179 = vmatprep.subr.bf16.mxu0 0
        %1180 = vmatpush2.bf16.msra.mxu0 0
        %1181 = vmatprep.subr.bf16.mxu0 0
        %1182 = vmatpush2.bf16.msra.mxu0 0
        %1183 = vmatprep.mubr.bf16.mxu0 0
        %1184 = vmatmul.mubr.bf16.gmra.mxu0 %v1140
        %v1185 = vpop.f32.mrf.mxu0
        %v1186 = vadd.f32 %v1131, %v1185
        %v1187 = vpop.f32.mrf.mxu0
        %v1188 = vpop.f32.mrf.mxu0
        %v1189 = vadd.f32 %v1131, %v1188
        %v1190 = vpop.f32.mrf.mxu0
        %1191 = vmatprep.mubr.bf16.mxu0 0
        %1192 = vmatmul.mubr.bf16.gmra.mxu0 %v1143
        %v1193 = vpop.f32.mrf.mxu0
        %v1194 = vadd.f32 %v1131, %v1193
        %v1195 = vpop.f32.mrf.mxu0
        %v1196 = vpop.f32.mrf.mxu0
        %v1197 = vadd.f32 %v1131, %v1196
        %v1198 = vpop.f32.mrf.mxu0
        %1199 = vmatprep.mubr.bf16.mxu0 0
        %1200 = vmatmul.mubr.bf16.gmra.mxu0 %v1146
        %v1201 = vpop.f32.mrf.mxu0
        %v1202 = vadd.f32 %v1131, %v1201
        %v1203 = vpop.f32.mrf.mxu0
        %v1204 = vpop.f32.mrf.mxu0
        %v1205 = vadd.f32 %v1131, %v1204
        %v1206 = vpop.f32.mrf.mxu0
        %1207 = vmatprep.mubr.bf16.mxu0 0
        %1208 = vmatmul.mubr.bf16.gmra.mxu0 %v1149
        %v1209 = vpop.f32.mrf.mxu0
        %v1210 = vadd.f32 %v1131, %v1209
        %v1211 = vpop.f32.mrf.mxu0
        %v1212 = vpop.f32.mrf.mxu0
        %v1213 = vadd.f32 %v1131, %v1212
        %v1214 = vpop.f32.mrf.mxu0
        %1215 = vdwg.mxu0
        %v1216 = vmax.f32 %v1186, 0.0
        %v1217 = vmax.f32 %v1189, 0.0
        %v1218 = vmax.f32 %v1194, 0.0
        %v1219 = vmax.f32 %v1197, 0.0
        %v1220 = vmax.f32 %v1202, 0.0
        %v1221 = vmax.f32 %v1205, 0.0
        %v1222 = vmax.f32 %v1210, 0.0
        %v1223 = vmax.f32 %v1213, 0.0
        %v1224 = vpack.c.bf16 %v1217, %v1216
        %v1225 = vpack.c.bf16 %v1219, %v1218
        %v1226 = vpack.c.bf16 %v1221, %v1220
        %v1227 = vpack.c.bf16 %v1223, %v1222
        %v1228 = vld [vmem:[%s10] sm:$0xf]
        %v1229 = vld [vmem:[%s10 + $0x4] sm:$0xf]
        %v1230 = vld [vmem:[%s10 + $0x8] sm:$0xf]
        %v1231 = vld [vmem:[%s10 + $0xc] sm:$0xf]
        %v1232 = vld [vmem:[%s10 + $0x10] sm:$0xf]
        %v1233 = vld [vmem:[%s10 + $0x14] sm:$0xf]
        %v1234 = vld [vmem:[%s10 + $0x18] sm:$0xf]
        %v1235 = vld [vmem:[%s10 + $0x1c] sm:$0xf]
        %v1236 = vld [vmem:[%s11] sm:$0x1]
        %v1238 = vlaneseq
        %v1239 = vshrl.u32 %v1238, 7
        %v1240 = vsub.s32 0, %v1239
        %v1241 = vrot.slane %v1236, %v1240
        %v1251 = vunpack.c.l.b16 %v1228
        %v1252 = vunpack.c.l.b16 %v1229
        %v1253 = vunpack.c.l.b16 %v1230
        %v1254 = vunpack.c.l.b16 %v1231
        %v1255 = vunpack.c.l.b16 %v1232
        %v1256 = vunpack.c.l.b16 %v1233
        %v1257 = vunpack.c.l.b16 %v1234
        %v1258 = vunpack.c.l.b16 %v1235
        %v1259 = vpack.c.b16 %v1252, %v1251
        %v1260 = vpack.c.b16 %v1254, %v1253
        %v1261 = vpack.c.b16 %v1256, %v1255
        %v1262 = vpack.c.b16 %v1258, %v1257
        %v1268 = vsel %vm540, %v1224, 0
        %v1271 = vsel %vm540, %v1225, 0
        %v1274 = vsel %vm540, %v1226, 0
        %v1277 = vsel %vm540, %v1227, 0
        %1279 = vmatprep.subr.bf16.mxu0 0
        %1280 = vmatpush1.bf16.msra.mxu0 0
        %1281 = vmatprep.subr.bf16.mxu0 0
        %1282 = vmatpush1.bf16.msra.mxu0 0
        %1283 = vmatprep.subr.bf16.mxu0 0
        %1284 = vmatpush1.bf16.msra.mxu0 0
        %1285 = vmatprep.subr.bf16.mxu0 0
        %1286 = vmatpush1.bf16.msra.mxu0 0
        %1287 = vmatprep.subr.bf16.mxu0 0
        %1288 = vmatpush1.bf16.msra.mxu0 %v1262
        %1289 = vmatprep.subr.bf16.mxu0 0
        %1290 = vmatpush1.bf16.msra.mxu0 %v1261
        %1291 = vmatprep.subr.bf16.mxu0 0
        %1292 = vmatpush1.bf16.msra.mxu0 %v1260
        %1293 = vmatprep.subr.bf16.mxu0 0
        %1294 = vmatpush1.bf16.msra.mxu0 %v1259
        %1295 = vmatprep.subr.bf16.mxu0 0
        %1296 = vmatpush2.bf16.msra.mxu0 0
        %1297 = vmatprep.subr.bf16.mxu0 0
        %1298 = vmatpush2.bf16.msra.mxu0 0
        %1299 = vmatprep.subr.bf16.mxu0 0
        %1300 = vmatpush2.bf16.msra.mxu0 0
        %1301 = vmatprep.subr.bf16.mxu0 0
        %1302 = vmatpush2.bf16.msra.mxu0 0
        %1303 = vmatprep.subr.bf16.mxu0 0
        %1304 = vmatpush2.bf16.msra.mxu0 0
        %1305 = vmatprep.subr.bf16.mxu0 0
        %1306 = vmatpush2.bf16.msra.mxu0 0
        %1307 = vmatprep.subr.bf16.mxu0 0
        %1308 = vmatpush2.bf16.msra.mxu0 0
        %1309 = vmatprep.subr.bf16.mxu0 0
        %1310 = vmatpush2.bf16.msra.mxu0 0
        %1311 = vmatprep.mubr.bf16.mxu0 0
        %1312 = vmatmul.mubr.bf16.gmra.mxu0 %v1268
        %v1313 = vpop.f32.mrf.mxu0
        %v1314 = vadd.f32 %v1241, %v1313
        %v1315 = vpop.f32.mrf.mxu0
        %v1316 = vpop.f32.mrf.mxu0
        %v1317 = vadd.f32 %v1241, %v1316
        %v1318 = vpop.f32.mrf.mxu0
        %1319 = vmatprep.mubr.bf16.mxu0 0
        %1320 = vmatmul.mubr.bf16.gmra.mxu0 %v1271
        %v1321 = vpop.f32.mrf.mxu0
        %v1322 = vadd.f32 %v1241, %v1321
        %v1323 = vpop.f32.mrf.mxu0
        %v1324 = vpop.f32.mrf.mxu0
        %v1325 = vadd.f32 %v1241, %v1324
        %v1326 = vpop.f32.mrf.mxu0
        %1327 = vmatprep.mubr.bf16.mxu0 0
        %1328 = vmatmul.mubr.bf16.gmra.mxu0 %v1274
        %v1329 = vpop.f32.mrf.mxu0
        %v1330 = vadd.f32 %v1241, %v1329
        %v1331 = vpop.f32.mrf.mxu0
        %v1332 = vpop.f32.mrf.mxu0
        %v1333 = vadd.f32 %v1241, %v1332
        %v1334 = vpop.f32.mrf.mxu0
        %1335 = vmatprep.mubr.bf16.mxu0 0
        %1336 = vmatmul.mubr.bf16.gmra.mxu0 %v1277
        %v1337 = vpop.f32.mrf.mxu0
        %v1338 = vadd.f32 %v1241, %v1337
        %v1339 = vpop.f32.mrf.mxu0
        %v1340 = vpop.f32.mrf.mxu0
        %v1341 = vadd.f32 %v1241, %v1340
        %v1342 = vpop.f32.mrf.mxu0
        %1343 = vdwg.mxu0
        %1352 = vrot.lane.b32.xlu0 %v1010, 96
        %v1353 = vpop.permute.xlu0 %1352
        %1354 = vrot.lane.b32.xlu0 %v1013, 96
        %v1355 = vpop.permute.xlu0 %1354
        %1356 = vrot.lane.b32.xlu0 %v1018, 96
        %v1357 = vpop.permute.xlu0 %1356
        %1358 = vrot.lane.b32.xlu0 %v1021, 96
        %v1359 = vpop.permute.xlu0 %1358
        %1360 = vrot.lane.b32.xlu0 %v1026, 96
        %v1361 = vpop.permute.xlu0 %1360
        %1362 = vrot.lane.b32.xlu0 %v1029, 96
        %v1363 = vpop.permute.xlu0 %1362
        %1364 = vrot.lane.b32.xlu0 %v1034, 96
        %v1365 = vpop.permute.xlu0 %1364
        %1366 = vrot.lane.b32.xlu0 %v1037, 96
        %v1367 = vpop.permute.xlu0 %1366
        %vm1376 = vcmask 785408
        %v1377 = vsel %vm1376, %v1314, %v1353
        %v1378 = vsel %vm1376, %v1317, %v1355
        %v1379 = vsel %vm1376, %v1322, %v1357
        %v1380 = vsel %vm1376, %v1325, %v1359
        %v1381 = vsel %vm1376, %v1330, %v1361
        %v1382 = vsel %vm1376, %v1333, %v1363
        %v1383 = vsel %vm1376, %v1338, %v1365
        %v1384 = vsel %vm1376, %v1341, %v1367
        %1385 = vst [vmem:[%s463] sm:$0xff] %v1377
        %1386 = vst [vmem:[%s463 + $0x8] sm:$0xff] %v1378
        %1387 = vst [vmem:[%s463 + $0x10] sm:$0xff] %v1379
        %1388 = vst [vmem:[%s463 + $0x18] sm:$0xff] %v1380
        %1389 = vst [vmem:[%s463 + $0x20] sm:$0xff] %v1381
        %1390 = vst [vmem:[%s463 + $0x28] sm:$0xff] %v1382
        %1391 = vst [vmem:[%s463 + $0x30] sm:$0xff] %v1383
        %1392 = vst [vmem:[%s463 + $0x38] sm:$0xff] %v1384
        %s1393 = sand.u32 %s323, 1
        %s1394 = scalar_lea.sflag [#allocation3], %s1393
        %s1395 = sand.u32 %s323, 1
        %s1396 = smul.addr %s1395, 64
        %s1397 = scalar_lea.vmem [#allocation2], %s1396
        // Predicated region
        $region73: #{tpu_custom_call.1} parent=71 // pred_check
          %p1398 = pneg %p333
        $region74: #{tpu_custom_call.1} parent=71 // pred_check_branch
          %1400 = sbr.rel (%p1398) target = $region76
        $region75: #{tpu_custom_call.1} parent=71 // pred_region
          %s1402 = ssub.s32 1024, 1024
          %1403 = vsyncadd %s1394, %s1402
          %s1404 = smul.addr %s27, 8
          %s1405 = smul.addr %s1404, 128
          %s1406 = scalar_lea.hbm %s13, %s1405
          %s1407 = sshll.u32 %s1397, 4
          %s1408 = int_to_ptr.vmem [resolvable:$true] %s1407
          %1413 = dma.vmem_to_hbm [thread:$0]  %s1408, 1024, %s1406, %s1394, 128, 128, 8
        $region76: #{tpu_custom_call.1} parent=71 // pred_fallthru
          _
      $region72: #{tpu_custom_call.1} parent=5 // pred_fallthru
        _
      %p1414 = scmp.le.s32.totalorder 2, %s22
      // Predicated region
      $region77: #{tpu_custom_call.1} parent=5 // pred_check
        %p1415 = pneg %p1414
      $region78: #{tpu_custom_call.1} parent=5 // pred_check_branch
        %1417 = sbr.rel (%p1415) target = $region80
      $region79: #{tpu_custom_call.1} parent=5 // pred_region
        %s1418 = ssub.s32 %s22, 2
        // Predicated region
        $region81: #{tpu_custom_call.1} parent=79 // pred_check
          %p1419 = pneg %p339
        $region82: #{tpu_custom_call.1} parent=79 // pred_check_branch
          %1421 = sbr.rel (%p1419) target = $region84
        $region83: #{tpu_custom_call.1} parent=79 // pred_region
          %s1422 = sand.u32 %s324, 1
          %s1423 = scalar_lea.sflag [#allocation3], %s1422
          %s1424 = sand.u32 %s324, 1
          %s1425 = smul.addr %s1424, 64
          %s1426 = scalar_lea.vmem [#allocation2], %s1425
          %1427 = dma.done %s1423, 1024
        $region84: #{tpu_custom_call.1} parent=79 // pred_fallthru
          _
      $region80: #{tpu_custom_call.1} parent=5 // pred_fallthru
        _
    $region6: #{tpu_custom_call.1} parent=1 // loop_footer
      %s26 = sadd.s32 1, %s22
    $region7: #{tpu_custom_call.1} parent=1 // loop_footer_branch
      %21 = sbr.rel target = $region3
    $region8: #{tpu_custom_call.1} parent=1 // loop_exit
      _
    %1428 = vsyncpa [#allocation3], 1
    %s1429 = scalar_lea.sflag [#allocation3], 1
    %1430 = vsyncpa %s1429, 1

</llo_original>
